<compile_context>
chip_gen: v7x
topology: tpu7x:2x2x1
jax: 0.10.0
libtpu: 0.0.40
codegen_flags: <defaults>
</compile_context>

<pallas_src>
import functools

import jax
import jax.numpy as jnp
from jax.experimental import pallas as pl
from jax.experimental.pallas import tpu as pltpu


def _cdc_kernel(x_ref, w_ref, o_ref, xpad_ref, patches_ref, *, H, W, K, pad):
    # x_ref:       (1, C_in, H, W)             bf16 input block (one image)
    # w_ref:       (TC_out, K*K*C_in)          bf16 theta-folded weights
    # o_ref:       (1, TC_out, H*W)            output block (lane axis = H*W)
    # xpad_ref:    (C_in, H+2*pad, W+2*pad)    f32 zero-padded image scratch
    # patches_ref: (K*K*C_in, H*W)             f32 im2col scratch
    C_in = x_ref.shape[1]
    j = pl.program_id(1)

    # The im2col patches depend only on the image, not on the C_out tile:
    # build them once per batch element (j == 0) and reuse across C_out tiles.
    @pl.when(j == 0)
    def _build_patches():
        # Zero-pad inside VMEM instead of a separate jnp.pad pass over HBM.
        xpad_ref[...] = jnp.zeros_like(xpad_ref)
        xpad_ref[:, pad:pad + H, pad:pad + W] = x_ref[0].astype(xpad_ref.dtype)
        # Stack the K*K taps along the contraction axis (im2col-lite).
        for kh in range(K):
            for kw in range(K):
                t = kh * K + kw
                patches_ref[t * C_in:(t + 1) * C_in, :] = (
                    xpad_ref[:, kh:kh + H, kw:kw + W].reshape(C_in, H * W))

    # One fat MXU contraction: (TC_out, K*K*C_in) @ (K*K*C_in, H*W),
    # bf16 operands, f32 accumulation, lane-dense (TC_out, H*W) result.
    acc = jnp.dot(w_ref[...],
                  patches_ref[...].astype(jnp.bfloat16),
                  preferred_element_type=jnp.float32)
    o_ref[0] = acc.astype(o_ref.dtype)


def conv2d_cd(x_nchw, weight_oihw, theta=0.7):
    """Conv2d_cd forward. x: (B, C_in, H, W), weight: (C_out, C_in, K, K).

    Supports the module defaults: stride=1, padding=(K-1)//2, dilation=1,
    groups=1, bias=False.
    """
    B, C_in, H, W = x_nchw.shape
    C_out, C_in_w, K, K2 = weight_oihw.shape
    assert C_in == C_in_w and K == K2 and K % 2 == 1
    pad = (K - 1) // 2
    out_dtype = x_nchw.dtype

    # Fold the central-difference term into the centre tap (exact):
    #   conv(x, W, pad=1) - theta * conv1x1(x, W.sum(kh,kw))
    # == conv(x, W_fold, pad=1),  W_fold[:, :, pad, pad] -= theta * W.sum((2,3))
    w_fold = weight_oihw.astype(jnp.float32)
    w_fold = w_fold.at[:, :, pad, pad].add(
        -float(theta) * jnp.sum(w_fold, axis=(2, 3)))

    # (C_out, C_in, K, K) -> (C_out, K*K*C_in); rows ordered as
    # (kh*K + kw)*C_in + ci to match the in-kernel im2col layout.
    w_mat = jnp.transpose(w_fold, (0, 2, 3, 1)).reshape(C_out, K * K * C_in)
    w_mat = w_mat.astype(jnp.bfloat16)

    # bf16 activations into the MXU; also halves HBM traffic for x.
    x = x_nchw.astype(jnp.bfloat16)

    # Tile C_out (single tile at these sizes; 128-wide tiles for big C_out).
    tc_out = 128 if C_out % 128 == 0 else C_out
    grid = (B, C_out // tc_out)
    # TODO(synk): add halo-overlapped H row tiles for large images so the
    # per-step working set stays within v7x's 64 MiB VMEM.

    kernel = functools.partial(_cdc_kernel, H=H, W=W, K=K, pad=pad)

    out_flat = pl.pallas_call(
        kernel,
        out_shape=jax.ShapeDtypeStruct((B, C_out, H * W), out_dtype),
        grid_spec=pltpu.PrefetchScalarGridSpec(
            num_scalar_prefetch=0,
            grid=grid,
            in_specs=[
                pl.BlockSpec((1, C_in, H, W), lambda b, j: (b, 0, 0, 0)),
                pl.BlockSpec((tc_out, K * K * C_in), lambda b, j: (j, 0)),
            ],
            out_specs=pl.BlockSpec((1, tc_out, H * W), lambda b, j: (b, j, 0)),
            scratch_shapes=[
                pltpu.VMEM((C_in, H + 2 * pad, W + 2 * pad), jnp.float32),
                pltpu.VMEM((K * K * C_in, H * W), jnp.float32),
            ],
        ),
        compiler_params=pltpu.CompilerParams(
            dimension_semantics=("parallel", "arbitrary"),
            vmem_limit_bytes=48 * 1024 * 1024,
        ),
    )(x, w_mat)

    # (B, C_out, H*W) -> (B, C_out, H, W): pure reshape, no transpose.
    return out_flat.reshape(B, C_out, H, W)


def _reference(x, weight, theta):
    out_normal = jax.lax.conv_general_dilated(
        x, weight, window_strides=(1, 1), padding=((1, 1), (1, 1)),
        dimension_numbers=("NCHW", "OIHW", "NCHW"))
    kdiff = weight.sum(axis=(2, 3))[:, :, None, None]
    out_diff = jax.lax.conv_general_dilated(
        x, kdiff, window_strides=(1, 1), padding="VALID",
        dimension_numbers=("NCHW", "OIHW", "NCHW"))
    return out_normal - theta * out_diff


if __name__ == "__main__":
    B, C_in, C_out, H, W, K = 2, 4, 8, 16, 16, 3
    theta = 0.7

    key = jax.random.PRNGKey(0)
    kx, kw = jax.random.split(key)
    x = jax.random.normal(kx, (B, C_in, H, W), dtype=jnp.float32)
    # nn.Conv2d-shaped weight: (C_out, C_in, K, K).
    weight = jax.random.normal(kw, (C_out, C_in, K, K), dtype=jnp.float32) * 0.1

    out = conv2d_cd(x, weight, theta=theta)
    jax.block_until_ready(out)

    ref = _reference(x, weight, theta)
    assert out.shape == (B, C_out, H, W)
    assert jnp.allclose(out, ref, atol=5e-2, rtol=5e-2), (
        float(jnp.max(jnp.abs(out - ref))))

    print("KERNEL_OK")
</pallas_src>

<mosaic_0001>
module attributes {stable_mosaic.version = 11 : i64} {
  func.func @_cdc_kernel(%arg0: i32, %arg1: i32, %arg2: memref<1x4x16x16xbf16, #tpu.memory_space<vmem>>, %arg3: memref<8x36xbf16, #tpu.memory_space<vmem>>, %arg4: memref<1x8x256xf32, #tpu.memory_space<vmem>>, %arg5: memref<4x18x18xf32, #tpu.memory_space<vmem>>, %arg6: memref<36x256xf32, #tpu.memory_space<vmem>>) attributes {dimension_semantics = [#tpu.dimension_semantics<parallel>, #tpu.dimension_semantics<arbitrary>], iteration_bounds = array<i64: 2, 1>, scalar_prefetch = 0 : i64, scratch_operands = 2 : i64, tpu.core_type = #tpu.core_type<tc>, window_params = [{transform_indices = @transform_0, window_bounds = array<i64: 1, 4, 16, 16>}, {transform_indices = @transform_1, window_bounds = array<i64: 8, 36>}, {transform_indices = @transform_2, window_bounds = array<i64: 1, 8, 256>}]} {
    %c0_i32 = arith.constant 0 : i32
    %0 = arith.cmpi eq, %arg1, %c0_i32 : i32
    %1 = arith.extui %0 : i1 to i32
    %c0_i32_0 = arith.constant 0 : i32
    %2 = arith.cmpi ne, %1, %c0_i32_0 : i32
    scf.if %2 {
      %cst_7 = arith.constant 0.000000e+00 : f32
      %10 = vector.broadcast %cst_7 : f32 to vector<4x18x18xf32>
      %c0_8 = arith.constant 0 : index
      %c0_9 = arith.constant 0 : index
      %c0_10 = arith.constant 0 : index
      %11 = vector.load %arg5[%c0_8, %c0_9, %c0_10] : memref<4x18x18xf32, #tpu.memory_space<vmem>>, vector<4x18x18xf32>
      tpu.vector_store %arg5[%c0_8, %c0_9, %c0_10], %10 {strides = array<i32>} : memref<4x18x18xf32, #tpu.memory_space<vmem>>, vector<4x18x18xf32>,
      %c0_11 = arith.constant 0 : index
      %c0_12 = arith.constant 0 : index
      %c0_13 = arith.constant 0 : index
      %c0_14 = arith.constant 0 : index
      %12 = vector.load %arg2[%c0_11, %c0_12, %c0_13, %c0_14] : memref<1x4x16x16xbf16, #tpu.memory_space<vmem>>, vector<1x4x16x16xbf16>
      %13 = vector.shape_cast %12 : vector<1x4x16x16xbf16> to vector<4x16x16xbf16>
      %14 = arith.extf %13 : vector<4x16x16xbf16> to vector<4x16x16xf32>
      %c0_15 = arith.constant 0 : index
      %c1 = arith.constant 1 : index
      %c1_16 = arith.constant 1 : index
      %15 = vector.load %arg5[%c0_15, %c1, %c1_16] : memref<4x18x18xf32, #tpu.memory_space<vmem>>, vector<4x16x16xf32>
      tpu.vector_store %arg5[%c0_15, %c1, %c1_16], %14 {strides = array<i32>} : memref<4x18x18xf32, #tpu.memory_space<vmem>>, vector<4x16x16xf32>,
      %c0_17 = arith.constant 0 : index
      %c0_18 = arith.constant 0 : index
      %c0_19 = arith.constant 0 : index
      %16 = vector.load %arg5[%c0_17, %c0_18, %c0_19] : memref<4x18x18xf32, #tpu.memory_space<vmem>>, vector<4x16x16xf32>
      %17 = vector.shape_cast %16 : vector<4x16x16xf32> to vector<4x256xf32>
      %c0_20 = arith.constant 0 : index
      %c0_21 = arith.constant 0 : index
      %18 = vector.load %arg6[%c0_20, %c0_21] : memref<36x256xf32, #tpu.memory_space<vmem>>, vector<4x256xf32>
      tpu.vector_store %arg6[%c0_20, %c0_21], %17 {strides = array<i32>} : memref<36x256xf32, #tpu.memory_space<vmem>>, vector<4x256xf32>,
      %c0_22 = arith.constant 0 : index
      %c0_23 = arith.constant 0 : index
      %c1_24 = arith.constant 1 : index
      %19 = vector.load %arg5[%c0_22, %c0_23, %c1_24] : memref<4x18x18xf32, #tpu.memory_space<vmem>>, vector<4x16x16xf32>
      %20 = vector.shape_cast %19 : vector<4x16x16xf32> to vector<4x256xf32>
      %c4 = arith.constant 4 : index
      %c0_25 = arith.constant 0 : index
      %21 = vector.load %arg6[%c4, %c0_25] : memref<36x256xf32, #tpu.memory_space<vmem>>, vector<4x256xf32>
      tpu.vector_store %arg6[%c4, %c0_25], %20 {strides = array<i32>} : memref<36x256xf32, #tpu.memory_space<vmem>>, vector<4x256xf32>,
      %c0_26 = arith.constant 0 : index
      %c0_27 = arith.constant 0 : index
      %c2 = arith.constant 2 : index
      %22 = vector.load %arg5[%c0_26, %c0_27, %c2] : memref<4x18x18xf32, #tpu.memory_space<vmem>>, vector<4x16x16xf32>
      %23 = vector.shape_cast %22 : vector<4x16x16xf32> to vector<4x256xf32>
      %c8 = arith.constant 8 : index
      %c0_28 = arith.constant 0 : index
      %24 = vector.load %arg6[%c8, %c0_28] : memref<36x256xf32, #tpu.memory_space<vmem>>, vector<4x256xf32>
      tpu.vector_store %arg6[%c8, %c0_28], %23 {strides = array<i32>} : memref<36x256xf32, #tpu.memory_space<vmem>>, vector<4x256xf32>,
      %c0_29 = arith.constant 0 : index
      %c1_30 = arith.constant 1 : index
      %c0_31 = arith.constant 0 : index
      %25 = vector.load %arg5[%c0_29, %c1_30, %c0_31] : memref<4x18x18xf32, #tpu.memory_space<vmem>>, vector<4x16x16xf32>
      %26 = vector.shape_cast %25 : vector<4x16x16xf32> to vector<4x256xf32>
      %c12 = arith.constant 12 : index
      %c0_32 = arith.constant 0 : index
      %27 = vector.load %arg6[%c12, %c0_32] : memref<36x256xf32, #tpu.memory_space<vmem>>, vector<4x256xf32>
      tpu.vector_store %arg6[%c12, %c0_32], %26 {strides = array<i32>} : memref<36x256xf32, #tpu.memory_space<vmem>>, vector<4x256xf32>,
      %c0_33 = arith.constant 0 : index
      %c1_34 = arith.constant 1 : index
      %c1_35 = arith.constant 1 : index
      %28 = vector.load %arg5[%c0_33, %c1_34, %c1_35] : memref<4x18x18xf32, #tpu.memory_space<vmem>>, vector<4x16x16xf32>
      %29 = vector.shape_cast %28 : vector<4x16x16xf32> to vector<4x256xf32>
      %c16 = arith.constant 16 : index
      %c0_36 = arith.constant 0 : index
      %30 = vector.load %arg6[%c16, %c0_36] : memref<36x256xf32, #tpu.memory_space<vmem>>, vector<4x256xf32>
      tpu.vector_store %arg6[%c16, %c0_36], %29 {strides = array<i32>} : memref<36x256xf32, #tpu.memory_space<vmem>>, vector<4x256xf32>,
      %c0_37 = arith.constant 0 : index
      %c1_38 = arith.constant 1 : index
      %c2_39 = arith.constant 2 : index
      %31 = vector.load %arg5[%c0_37, %c1_38, %c2_39] : memref<4x18x18xf32, #tpu.memory_space<vmem>>, vector<4x16x16xf32>
      %32 = vector.shape_cast %31 : vector<4x16x16xf32> to vector<4x256xf32>
      %c20 = arith.constant 20 : index
      %c0_40 = arith.constant 0 : index
      %33 = vector.load %arg6[%c20, %c0_40] : memref<36x256xf32, #tpu.memory_space<vmem>>, vector<4x256xf32>
      tpu.vector_store %arg6[%c20, %c0_40], %32 {strides = array<i32>} : memref<36x256xf32, #tpu.memory_space<vmem>>, vector<4x256xf32>,
      %c0_41 = arith.constant 0 : index
      %c2_42 = arith.constant 2 : index
      %c0_43 = arith.constant 0 : index
      %34 = vector.load %arg5[%c0_41, %c2_42, %c0_43] : memref<4x18x18xf32, #tpu.memory_space<vmem>>, vector<4x16x16xf32>
      %35 = vector.shape_cast %34 : vector<4x16x16xf32> to vector<4x256xf32>
      %c24 = arith.constant 24 : index
      %c0_44 = arith.constant 0 : index
      %36 = vector.load %arg6[%c24, %c0_44] : memref<36x256xf32, #tpu.memory_space<vmem>>, vector<4x256xf32>
      tpu.vector_store %arg6[%c24, %c0_44], %35 {strides = array<i32>} : memref<36x256xf32, #tpu.memory_space<vmem>>, vector<4x256xf32>,
      %c0_45 = arith.constant 0 : index
      %c2_46 = arith.constant 2 : index
      %c1_47 = arith.constant 1 : index
      %37 = vector.load %arg5[%c0_45, %c2_46, %c1_47] : memref<4x18x18xf32, #tpu.memory_space<vmem>>, vector<4x16x16xf32>
      %38 = vector.shape_cast %37 : vector<4x16x16xf32> to vector<4x256xf32>
      %c28 = arith.constant 28 : index
      %c0_48 = arith.constant 0 : index
      %39 = vector.load %arg6[%c28, %c0_48] : memref<36x256xf32, #tpu.memory_space<vmem>>, vector<4x256xf32>
      tpu.vector_store %arg6[%c28, %c0_48], %38 {strides = array<i32>} : memref<36x256xf32, #tpu.memory_space<vmem>>, vector<4x256xf32>,
      %c0_49 = arith.constant 0 : index
      %c2_50 = arith.constant 2 : index
      %c2_51 = arith.constant 2 : index
      %40 = vector.load %arg5[%c0_49, %c2_50, %c2_51] : memref<4x18x18xf32, #tpu.memory_space<vmem>>, vector<4x16x16xf32>
      %41 = vector.shape_cast %40 : vector<4x16x16xf32> to vector<4x256xf32>
      %c32 = arith.constant 32 : index
      %c0_52 = arith.constant 0 : index
      %42 = vector.load %arg6[%c32, %c0_52] : memref<36x256xf32, #tpu.memory_space<vmem>>, vector<4x256xf32>
      tpu.vector_store %arg6[%c32, %c0_52], %41 {strides = array<i32>} : memref<36x256xf32, #tpu.memory_space<vmem>>, vector<4x256xf32>,
    } else {
    }
    %c0 = arith.constant 0 : index
    %c0_1 = arith.constant 0 : index
    %3 = vector.load %arg3[%c0, %c0_1] : memref<8x36xbf16, #tpu.memory_space<vmem>>, vector<8x36xbf16>
    %c0_2 = arith.constant 0 : index
    %c0_3 = arith.constant 0 : index
    %4 = vector.load %arg6[%c0_2, %c0_3] : memref<36x256xf32, #tpu.memory_space<vmem>>, vector<36x256xf32>
    %5 = arith.truncf %4 : vector<36x256xf32> to vector<36x256xbf16>
    %cst = arith.constant dense<0.000000e+00> : vector<8x256xf32>
    %6 = tpu.matmul %3, %5, %cst {dimension_numbers = #tpu.dot_dimension_numbers<[1], [0], [0], [1], [0, 0, 1, 1], [], []>} : vector<8x36xbf16>, vector<36x256xbf16>, vector<8x256xf32> -> vector<8x256xf32>
    %c0_4 = arith.constant 0 : index
    %c0_5 = arith.constant 0 : index
    %c0_6 = arith.constant 0 : index
    %7 = vector.load %arg4[%c0_4, %c0_5, %c0_6] : memref<1x8x256xf32, #tpu.memory_space<vmem>>, vector<1x8x256xf32>
    %8 = vector.shape_cast %7 : vector<1x8x256xf32> to vector<8x256xf32>
    %9 = vector.shape_cast %6 : vector<8x256xf32> to vector<1x8x256xf32>
    tpu.vector_store %arg4[%c0_4, %c0_5, %c0_6], %9 {strides = array<i32>} : memref<1x8x256xf32, #tpu.memory_space<vmem>>, vector<1x8x256xf32>,
    return
  }
  func.func @transform_0(%arg0: i32, %arg1: i32) -> (i32, i32, i32, i32) {
    %c0_i32 = arith.constant 0 : i32
    %c0_i32_0 = arith.constant 0 : i32
    %c0_i32_1 = arith.constant 0 : i32
    %c0_i32_2 = arith.constant 0 : i32
    return %arg0, %c0_i32, %c0_i32_0, %c0_i32_1 : i32, i32, i32, i32
  }
  func.func @transform_1(%arg0: i32, %arg1: i32) -> (i32, i32) {
    %c0_i32 = arith.constant 0 : i32
    %c0_i32_0 = arith.constant 0 : i32
    return %arg1, %c0_i32 : i32, i32
  }
  func.func @transform_2(%arg0: i32, %arg1: i32) -> (i32, i32, i32) {
    %c0_i32 = arith.constant 0 : i32
    %c0_i32_0 = arith.constant 0 : i32
    return %arg0, %arg1, %c0_i32 : i32, i32, i32
  }
}

</mosaic_0001>

<llo_original>
// kernel: tpu_custom_call.1
$region0: #{tpu_custom_call.1}
  #allocation0 [shape = 'u32[]', space=smem, size = 0x4, offset = 0x4, fixed_abs, tag = 'smem constant byte address 0x4 - core index']
  #allocation1 [shape = 'u32[144,128]{1,0:T(1,128)}', space=vmem, size = 0x12000, scoped, tag = 'internal scratch']
  #allocation2 [shape = 'f32[4,18,18]{2,1,0:T(8,128)}', space=vmem, size = 0xc000, scoped, tag = 'scratch operand']
  #allocation3 [shape = 'f32[36,256]{1,0:T(8,128)}', space=vmem, size = 0xa000, scoped, tag = 'scratch operand']
  %s0 = inlined_call_operand.hbm [shape: bf16[2,4,16,16], index: 0, kind: input, shape index: {}]
  %s1 = inlined_call_operand.hbm [shape: bf16[8,36], index: 1, kind: input, shape index: {}]
  %s2 = inlined_call_operand.hbm [shape: f32[2,8,256], index: 2, kind: output, shape index: {}]
  %s3 = sld [smem:[#allocation0]]
  $region53: #{tpu_custom_call.1} parent=0
    _
  %s5 = ssub.s32 1, %s3
  %s6 = scalar_select 0, %s5, %s3
  $region1: #{tpu_custom_call.1} parent=0
    #allocation4 [shape = 'u8[32768]{0}', space=vmem, size = 0x8000, scoped, tag = 'input window, operand 0']
    #allocation5 [shape = 's32[2]{0}', space=sflag, size = 0x8, scoped, tag = 'scoped memory for tpu_custom_call.1']
    #allocation6 [shape = 's32[2]{0}', space=sflag, size = 0x8, scoped, tag = 'scoped memory for tpu_custom_call.1']
    #allocation7 [shape = 'u8[2048]{0}', space=vmem, size = 0x800, scoped, tag = 'input window, operand 1, single buffered']
    #allocation8 [shape = 's32[1]{0}', space=sflag, size = 0x4, scoped, tag = 'scoped memory for tpu_custom_call.1']
    #allocation9 [shape = 'u8[16384]{0}', space=vmem, size = 0x4000, scoped, tag = 'output window, operand 0']
    %7 = vsyncpa [#allocation5], 0
    %s8 = scalar_lea.sflag [#allocation5], 1
    %9 = vsyncpa %s8, 0
    %10 = vsyncpa [#allocation8], 0
    %11 = vsyncpa [#allocation6], 0
    %s12 = scalar_lea.sflag [#allocation6], 1
    %13 = vsyncpa %s12, 0
    loop: start=0, step=1, limit=4
    $region2: #{tpu_custom_call.1} parent=1 // loop_pre_header
      _
    $region3: #{tpu_custom_call.1} parent=1 // loop_header
      %s15 = sphi 0, %s19
      %p16 = scmp.ge.s32.totalorder %s15, 4
      %s22 = sphi 0, %s34
      %s23 = sphi 0, %s30
      %s24 = sphi 0, %s22
      %s25 = sphi 0, %s23
      %s26 = sphi 0, %s24
      %s27 = sphi 0, %s25
      %s37 = sphi 0, %s39
      %s40 = sphi 0, %s37
      %s41 = sphi 0, %s40
      %s57 = sphi 0, %s41
      %s63 = sphi 0, %s65
      %s66 = sphi 0, %s63
      %s67 = sphi 0, %s66
      %s83 = sphi 0, %s67
      %s91 = sphi 0, %s93
      %s94 = sphi 0, %s91
      %s95 = sphi 0, %s94
      %s111 = sphi 0, %s95
    $region4: #{tpu_custom_call.1} parent=1 // loop_header_branch
      %18 = sbr.rel (%p16) target = $region8
    $region5: #{tpu_custom_call.1} parent=1 // loop_body
      %s20 = ssub.s32 %s15, 1
      %s21 = ssub.s32 %s15, 2
      %s28 = sadd.s32 1, %s23
      %p29 = scmp.ge.s32.totalorder %s28, 1
      %s30 = scalar_select %p29, 0, %s28
      %s31 = sadd.s32 1, %s22
      %s32 = scalar_select %p29, %s31, %s22
      %p33 = scmp.ge.s32.totalorder %s32, 2
      %s34 = scalar_select %p33, 0, %s32
      %s35 = ssub.s32 %s22, %s34
      %p36 = scmp.eq.s32.totalorder %s35, 0
      %s38 = sadd.s32 %s37, 1
      %s39 = scalar_select %p36, %s37, %s38
      %p42 = pneg %p36
      %p43 = scmp.eq.s32.totalorder %s15, 1
      %p44 = por %p42, %p43
      %p45 = scmp.ne.s32.totalorder %s37, %s40
      %p46 = scmp.eq.s32.totalorder %s15, 0
      %p47 = por %p45, %p46
      %p48 = scmp.ne.s32.totalorder %s37, %s40
      %p49 = scmp.eq.s32.totalorder %s20, 1
      %p50 = por %p48, %p49
      %p51 = scmp.ne.s32.totalorder %s40, %s41
      %p52 = scmp.eq.s32.totalorder %s20, 0
      %p53 = por %p51, %p52
      %p54 = scmp.ne.s32.totalorder %s40, %s41
      %p55 = scmp.eq.s32.totalorder %s21, 1
      %p56 = por %p54, %p55
      %p58 = scmp.ne.s32.totalorder %s41, %s57
      %p59 = scmp.eq.s32.totalorder %s21, 0
      %p60 = por %p58, %p59
      %s61 = ssub.s32 %s23, %s30
      %p62 = scmp.eq.s32.totalorder %s61, 0
      %s64 = sadd.s32 %s63, 1
      %s65 = scalar_select %p62, %s63, %s64
      %p68 = pneg %p62
      %p69 = scmp.eq.s32.totalorder %s15, 1
      %p70 = por %p68, %p69
      %p71 = scmp.ne.s32.totalorder %s63, %s66
      %p72 = scmp.eq.s32.totalorder %s15, 0
      %p73 = por %p71, %p72
      %p74 = scmp.ne.s32.totalorder %s63, %s66
      %p75 = scmp.eq.s32.totalorder %s20, 1
      %p76 = por %p74, %p75
      %p77 = scmp.ne.s32.totalorder %s66, %s67
      %p78 = scmp.eq.s32.totalorder %s20, 0
      %p79 = por %p77, %p78
      %p80 = scmp.ne.s32.totalorder %s66, %s67
      %p81 = scmp.eq.s32.totalorder %s21, 1
      %p82 = por %p80, %p81
      %p84 = scmp.ne.s32.totalorder %s67, %s83
      %p85 = scmp.eq.s32.totalorder %s21, 0
      %p86 = por %p84, %p85
      %s87 = ssub.s32 %s22, %s34
      %s88 = ssub.s32 %s23, %s30
      %s89 = sor.u32 %s87, %s88
      %p90 = scmp.eq.s32.totalorder %s89, 0
      %s92 = sadd.s32 %s91, 1
      %s93 = scalar_select %p90, %s91, %s92
      %p96 = pneg %p90
      %p97 = scmp.eq.s32.totalorder %s15, 1
      %p98 = por %p96, %p97
      %p99 = scmp.ne.s32.totalorder %s91, %s94
      %p100 = scmp.eq.s32.totalorder %s15, 0
      %p101 = por %p99, %p100
      %p102 = scmp.ne.s32.totalorder %s91, %s94
      %p103 = scmp.eq.s32.totalorder %s20, 1
      %p104 = por %p102, %p103
      %p105 = scmp.ne.s32.totalorder %s94, %s95
      %p106 = scmp.eq.s32.totalorder %s20, 0
      %p107 = por %p105, %p106
      %p108 = scmp.ne.s32.totalorder %s94, %s95
      %p109 = scmp.eq.s32.totalorder %s21, 1
      %p110 = por %p108, %p109
      %p112 = scmp.ne.s32.totalorder %s95, %s111
      %p113 = scmp.eq.s32.totalorder %s21, 0
      %p114 = por %p112, %p113
      %p115 = scmp.le.s32.totalorder 1, %s15
      %p116 = scmp.lt.s32.totalorder %s15, 3
      %p117 = pnand %p115, %p116
      %p118 = pneg %p117
      // Predicated region
      $region9: #{tpu_custom_call.1} parent=5 // pred_check
        _
      $region10: #{tpu_custom_call.1} parent=5 // pred_check_branch
        %120 = sbr.rel (%p117) target = $region12
      $region11: #{tpu_custom_call.1} parent=5 // pred_region
        %s121 = ssub.s32 %s15, 1
        // Predicated region
        $region13: #{tpu_custom_call.1} parent=11 // pred_check
          %p122 = pneg %p79
        $region14: #{tpu_custom_call.1} parent=11 // pred_check_branch
          %124 = sbr.rel (%p122) target = $region16
        $region15: #{tpu_custom_call.1} parent=11 // pred_region
          %s126 = ssub.s32 64, 64
          %127 = vsyncadd [#allocation8], %s126
          %s128 = smul.addr %s25, 64
          %s129 = scalar_lea.hbm %s1, %s128
          %s131 = sshll.u32 [#allocation7], 4
          %s132 = int_to_ptr.vmem [resolvable:$true] %s131
          %134 = dma.hbm_to_vmem [thread:$0]  %s129, 64, %s132, [#allocation8]
        $region16: #{tpu_custom_call.1} parent=11 // pred_fallthru
          _
      $region12: #{tpu_custom_call.1} parent=5 // pred_fallthru
        _
      %p135 = scmp.lt.s32.totalorder %s15, 2
      // Predicated region
      $region17: #{tpu_custom_call.1} parent=5 // pred_check
        %p136 = pneg %p135
      $region18: #{tpu_custom_call.1} parent=5 // pred_check_branch
        %138 = sbr.rel (%p136) target = $region20
      $region19: #{tpu_custom_call.1} parent=5 // pred_region
        // Predicated region
        $region21: #{tpu_custom_call.1} parent=19 // pred_check
          %p139 = pneg %p47
        $region22: #{tpu_custom_call.1} parent=19 // pred_check_branch
          %141 = sbr.rel (%p139) target = $region24
        $region23: #{tpu_custom_call.1} parent=19 // pred_region
          %s142 = sand.u32 %s37, 1
          %s143 = scalar_lea.sflag [#allocation5], %s142
          %s144 = sand.u32 %s37, 1
          %s145 = smul.addr %s144, 32
          %s146 = scalar_lea.vmem [#allocation4], %s145
          %s148 = ssub.s32 512, 512
          %149 = vsyncadd %s143, %s148
          %s150 = smul.addr %s22, 8
          %s151 = smul.addr %s150, 64
          %s152 = scalar_lea.hbm %s0, %s151
          %s153 = sshll.u32 %s146, 4
          %s154 = int_to_ptr.vmem [resolvable:$true] %s153
          %159 = dma.hbm_to_vmem [thread:$0]  %s152, 512, %s154, %s143, 64, 64, 4
        $region24: #{tpu_custom_call.1} parent=19 // pred_fallthru
          _
      $region20: #{tpu_custom_call.1} parent=5 // pred_fallthru
        _
      %p160 = scmp.le.s32.totalorder 1, %s15
      %p161 = scmp.lt.s32.totalorder %s15, 3
      %p162 = pnand %p160, %p161
      %p163 = pneg %p162
      // Predicated region
      $region25: #{tpu_custom_call.1} parent=5 // pred_check
        _
      $region26: #{tpu_custom_call.1} parent=5 // pred_check_branch
        %165 = sbr.rel (%p162) target = $region28
      $region27: #{tpu_custom_call.1} parent=5 // pred_region
        %s166 = ssub.s32 %s15, 1
        %s167 = sand.u32 %s40, 1
        %s168 = scalar_lea.sflag [#allocation5], %s167
        %s169 = sand.u32 %s40, 1
        %s170 = smul.addr %s169, 32
        %s171 = scalar_lea.vmem [#allocation4], %s170
        // Predicated region
        $region29: #{tpu_custom_call.1} parent=27 // pred_check
          %p172 = pneg %p53
        $region30: #{tpu_custom_call.1} parent=27 // pred_check_branch
          %174 = sbr.rel (%p172) target = $region32
        $region31: #{tpu_custom_call.1} parent=27 // pred_region
          %175 = dma.done %s168, 512
        $region32: #{tpu_custom_call.1} parent=27 // pred_fallthru
          _
        // Predicated region
        $region33: #{tpu_custom_call.1} parent=27 // pred_check
          %p176 = pneg %p79
        $region34: #{tpu_custom_call.1} parent=27 // pred_check_branch
          %178 = sbr.rel (%p176) target = $region36
        $region35: #{tpu_custom_call.1} parent=27 // pred_region
          %179 = dma.done [#allocation8], 64
        $region36: #{tpu_custom_call.1} parent=27 // pred_fallthru
          _
        %s180 = sand.u32 %s40, 1
        %s181 = scalar_lea.sflag [#allocation5], %s180
        %s182 = sand.u32 %s40, 1
        %s183 = smul.addr %s182, 32
        %s184 = scalar_lea.vmem [#allocation4], %s183
        %p185 = pneg %p53
        %p186 = pneg %p50
        %p187 = pneg %p79
        %p188 = pneg %p76
        %p189 = pneg %p107
        %p190 = pneg %p104
        %s191 = sand.u32 %s94, 1
        %s192 = scalar_lea.sflag [#allocation6], %s191
        %s193 = sand.u32 %s94, 1
        %s194 = smul.addr %s193, 16
        %s195 = scalar_lea.vmem [#allocation9], %s194
        %p197 = scmp.eq.s32.totalorder %s25, 0
        // Predicated region
        $region37: #{tpu_custom_call.1} parent=27 // pred_check
          %p198 = pneg %p197
        $region38: #{tpu_custom_call.1} parent=27 // pred_check_branch
          %200 = sbr.rel (%p198) target = $region40
        $region39: #{tpu_custom_call.1} parent=27 // pred_region
          %vm201 = vcmask 146432
          %202 = vst.msk [vmem:[#allocation2] sm:$0xff] %vm201, 0.0
          %203 = vst.msk [vmem:[#allocation2 + $0x8] sm:$0xff] %vm201, 0.0
          %vm204 = vcmask 140288
          %205 = vst.msk [vmem:[#allocation2 + $0x10] sm:$0x3] %vm204, 0.0
          %206 = vst.msk [vmem:[#allocation2 + $0x18] sm:$0xff] %vm201, 0.0
          %207 = vst.msk [vmem:[#allocation2 + $0x20] sm:$0xff] %vm201, 0.0
          %208 = vst.msk [vmem:[#allocation2 + $0x28] sm:$0x3] %vm204, 0.0
          %209 = vst.msk [vmem:[#allocation2 + $0x30] sm:$0xff] %vm201, 0.0
          %210 = vst.msk [vmem:[#allocation2 + $0x38] sm:$0xff] %vm201, 0.0
          %211 = vst.msk [vmem:[#allocation2 + $0x40] sm:$0x3] %vm204, 0.0
          %212 = vst.msk [vmem:[#allocation2 + $0x48] sm:$0xff] %vm201, 0.0
          %213 = vst.msk [vmem:[#allocation2 + $0x50] sm:$0xff] %vm201, 0.0
          %214 = vst.msk [vmem:[#allocation2 + $0x58] sm:$0x3] %vm204, 0.0
          %v215 = vld [vmem:[%s171] sm:$0xf]
          %v216 = vld [vmem:[%s171 + $0x4] sm:$0xf]
          %v217 = vld [vmem:[%s171 + $0x8] sm:$0xf]
          %v218 = vld [vmem:[%s171 + $0xc] sm:$0xf]
          %v219 = vld [vmem:[%s171 + $0x10] sm:$0xf]
          %v220 = vld [vmem:[%s171 + $0x14] sm:$0xf]
          %v221 = vld [vmem:[%s171 + $0x18] sm:$0xf]
          %v222 = vld [vmem:[%s171 + $0x1c] sm:$0xf]
          %v223 = vunpack.c.l.bf16 %v215
          %v224 = vunpack.c.l.bf16 %v216
          %v225 = vunpack.c.l.bf16 %v217
          %v226 = vunpack.c.l.bf16 %v218
          %v227 = vunpack.c.l.bf16 %v219
          %v228 = vunpack.c.l.bf16 %v220
          %v229 = vunpack.c.l.bf16 %v221
          %v230 = vunpack.c.l.bf16 %v222
          %239 = vrot.lane.b32.xlu0 %v223, 1
          %v240 = vpop.permute.xlu0 %239
          %241 = vrot.lane.b32.xlu0 %v224, 1
          %v242 = vpop.permute.xlu0 %241
          %243 = vrot.lane.b32.xlu0 %v225, 1
          %v244 = vpop.permute.xlu0 %243
          %245 = vrot.lane.b32.xlu0 %v226, 1
          %v246 = vpop.permute.xlu0 %245
          %247 = vrot.lane.b32.xlu0 %v227, 1
          %v248 = vpop.permute.xlu0 %247
          %249 = vrot.lane.b32.xlu0 %v228, 1
          %v250 = vpop.permute.xlu0 %249
          %251 = vrot.lane.b32.xlu0 %v229, 1
          %v252 = vpop.permute.xlu0 %251
          %253 = vrot.lane.b32.xlu0 %v230, 1
          %v254 = vpop.permute.xlu0 %253
          %vm263 = vcmask 138248
          %264 = vst.msk [vmem:[#allocation2 + $0x1] sm:$0xff] %vm263, %v240
          %265 = vst.msk [vmem:[#allocation2 + $0x9] sm:$0xff] %vm263, %v242
          %266 = vst.msk [vmem:[#allocation2 + $0x19] sm:$0xff] %vm263, %v244
          %267 = vst.msk [vmem:[#allocation2 + $0x21] sm:$0xff] %vm263, %v246
          %268 = vst.msk [vmem:[#allocation2 + $0x31] sm:$0xff] %vm263, %v248
          %269 = vst.msk [vmem:[#allocation2 + $0x39] sm:$0xff] %vm263, %v250
          %270 = vst.msk [vmem:[#allocation2 + $0x49] sm:$0xff] %vm263, %v252
          %271 = vst.msk [vmem:[#allocation2 + $0x51] sm:$0xff] %vm263, %v254
          %v272 = vld [vmem:[#allocation2] sm:$0xff]
          %v273 = vld [vmem:[#allocation2 + $0x8] sm:$0xff]
          %v274 = vld [vmem:[#allocation2 + $0x18] sm:$0xff]
          %v275 = vld [vmem:[#allocation2 + $0x20] sm:$0xff]
          %v276 = vld [vmem:[#allocation2 + $0x30] sm:$0xff]
          %v277 = vld [vmem:[#allocation2 + $0x38] sm:$0xff]
          %v278 = vld [vmem:[#allocation2 + $0x48] sm:$0xff]
          %v279 = vld [vmem:[#allocation2 + $0x50] sm:$0xff]
          %v280 = vcombine.low %v272, %v276
          %v281 = vcombine.high %v272, %v276
          %v283 = vunpack.c.l.s4 1983009808
          %v284 = vunpack.c.0.s8 %v283
          %v285 = vlaneseq
          %v286 = vshrl.u32 %v285, 7
          %v287 = vsub.s32 %v284, %v286
          %v288 = vrot.slane %v280, %v287
          %v290 = vunpack.c.l.s4 1983009808
          %v291 = vunpack.c.0.s8 %v290
          %v292 = vlaneseq
          %v293 = vshrl.u32 %v292, 7
          %v294 = vsub.s32 %v291, %v293
          %v295 = vrot.slane %v281, %v294
          %v296 = vcombine.low %v274, %v278
          %v297 = vcombine.high %v274, %v278
          %v299 = vunpack.c.l.s4 1983009808
          %v300 = vunpack.c.0.s8 %v299
          %v301 = vlaneseq
          %v302 = vshrl.u32 %v301, 7
          %v303 = vsub.s32 %v300, %v302
          %v304 = vrot.slane %v296, %v303
          %v306 = vunpack.c.l.s4 1983009808
          %v307 = vunpack.c.0.s8 %v306
          %v308 = vlaneseq
          %v309 = vshrl.u32 %v308, 7
          %v310 = vsub.s32 %v307, %v309
          %v311 = vrot.slane %v297, %v310
          %v312 = vcombine.low %v288, %v304
          %v313 = vcombine.high %v288, %v304
          %v315 = vunpack.c.l.s4 1934713408
          %v316 = vunpack.c.0.s8 %v315
          %v317 = vlaneseq
          %v318 = vshrl.u32 %v317, 7
          %v319 = vsub.s32 %v316, %v318
          %v320 = vrot.slane %v312, %v319
          %v322 = vunpack.c.l.s4 1934713408
          %v323 = vunpack.c.0.s8 %v322
          %v324 = vlaneseq
          %v325 = vshrl.u32 %v324, 7
          %v326 = vsub.s32 %v323, %v325
          %v327 = vrot.slane %v313, %v326
          %v328 = vcombine.low %v295, %v311
          %v329 = vcombine.high %v295, %v311
          %v331 = vunpack.c.l.s4 1934713408
          %v332 = vunpack.c.0.s8 %v331
          %v333 = vlaneseq
          %v334 = vshrl.u32 %v333, 7
          %v335 = vsub.s32 %v332, %v334
          %v336 = vrot.slane %v328, %v335
          %v338 = vunpack.c.l.s4 1934713408
          %v339 = vunpack.c.0.s8 %v338
          %v340 = vlaneseq
          %v341 = vshrl.u32 %v340, 7
          %v342 = vsub.s32 %v339, %v341
          %v343 = vrot.slane %v329, %v342
          %v344 = vcombine.high %v320, 0.0
          %v345 = vcombine.high %v327, 0.0
          %v346 = vcombine.high %v336, 0.0
          %v347 = vcombine.high %v343, 0.0
          %v348 = vcombine.low %v273, %v277
          %v349 = vcombine.high %v273, %v277
          %v351 = vunpack.c.l.s4 1983009808
          %v352 = vunpack.c.0.s8 %v351
          %v353 = vlaneseq
          %v354 = vshrl.u32 %v353, 7
          %v355 = vsub.s32 %v352, %v354
          %v356 = vrot.slane %v348, %v355
          %v358 = vunpack.c.l.s4 1983009808
          %v359 = vunpack.c.0.s8 %v358
          %v360 = vlaneseq
          %v361 = vshrl.u32 %v360, 7
          %v362 = vsub.s32 %v359, %v361
          %v363 = vrot.slane %v349, %v362
          %v364 = vcombine.low %v275, %v279
          %v365 = vcombine.high %v275, %v279
          %v367 = vunpack.c.l.s4 1983009808
          %v368 = vunpack.c.0.s8 %v367
          %v369 = vlaneseq
          %v370 = vshrl.u32 %v369, 7
          %v371 = vsub.s32 %v368, %v370
          %v372 = vrot.slane %v364, %v371
          %v374 = vunpack.c.l.s4 1983009808
          %v375 = vunpack.c.0.s8 %v374
          %v376 = vlaneseq
          %v377 = vshrl.u32 %v376, 7
          %v378 = vsub.s32 %v375, %v377
          %v379 = vrot.slane %v365, %v378
          %v380 = vcombine.low %v356, %v372
          %v381 = vcombine.high %v356, %v372
          %v383 = vunpack.c.l.s4 1934713408
          %v384 = vunpack.c.0.s8 %v383
          %v385 = vlaneseq
          %v386 = vshrl.u32 %v385, 7
          %v387 = vsub.s32 %v384, %v386
          %v388 = vrot.slane %v380, %v387
          %v390 = vunpack.c.l.s4 1934713408
          %v391 = vunpack.c.0.s8 %v390
          %v392 = vlaneseq
          %v393 = vshrl.u32 %v392, 7
          %v394 = vsub.s32 %v391, %v393
          %v395 = vrot.slane %v381, %v394
          %v396 = vcombine.low %v363, %v379
          %v397 = vcombine.high %v363, %v379
          %v399 = vunpack.c.l.s4 1934713408
          %v400 = vunpack.c.0.s8 %v399
          %v401 = vlaneseq
          %v402 = vshrl.u32 %v401, 7
          %v403 = vsub.s32 %v400, %v402
          %v404 = vrot.slane %v396, %v403
          %v406 = vunpack.c.l.s4 1934713408
          %v407 = vunpack.c.0.s8 %v406
          %v408 = vlaneseq
          %v409 = vshrl.u32 %v408, 7
          %v410 = vsub.s32 %v407, %v409
          %v411 = vrot.slane %v397, %v410
          %v412 = vcombine.high %v388, 0.0
          %v413 = vcombine.high %v395, 0.0
          %v414 = vcombine.high %v404, 0.0
          %v415 = vcombine.high %v411, 0.0
          %417 = vrot.lane.b32.xlu0 %v344, 16
          %v418 = vpop.permute.xlu0 %417
          %421 = vrot.lane.b32.xlu0 %v327, 32
          %v422 = vpop.permute.xlu0 %421
          %425 = vrot.lane.b32.xlu0 %v345, 48
          %v426 = vpop.permute.xlu0 %425
          %429 = vrot.lane.b32.xlu0 %v336, 64
          %v430 = vpop.permute.xlu0 %429
          %433 = vrot.lane.b32.xlu0 %v346, 80
          %v434 = vpop.permute.xlu0 %433
          %437 = vrot.lane.b32.xlu0 %v343, 96
          %v438 = vpop.permute.xlu0 %437
          %441 = vrot.lane.b32.xlu0 %v347, 112
          %v442 = vpop.permute.xlu0 %441
          %445 = vrot.lane.b32.xlu0 %v412, 16
          %v446 = vpop.permute.xlu0 %445
          %449 = vrot.lane.b32.xlu0 %v395, 32
          %v450 = vpop.permute.xlu0 %449
          %453 = vrot.lane.b32.xlu0 %v413, 48
          %v454 = vpop.permute.xlu0 %453
          %457 = vrot.lane.b32.xlu0 %v404, 64
          %v458 = vpop.permute.xlu0 %457
          %461 = vrot.lane.b32.xlu0 %v414, 80
          %v462 = vpop.permute.xlu0 %461
          %465 = vrot.lane.b32.xlu0 %v411, 96
          %v466 = vpop.permute.xlu0 %465
          %469 = vrot.lane.b32.xlu0 %v415, 112
          %v470 = vpop.permute.xlu0 %469
          %vm472 = vcmask 130048
          %v473 = vsel %vm472, %v320, %v418
          %vm474 = vcmask 261120
          %v475 = vsel %vm474, %v473, %v422
          %vm476 = vcmask 392192
          %v477 = vsel %vm476, %v475, %v426
          %vm478 = vcmask 523264
          %v479 = vsel %vm478, %v477, %v430
          %vm480 = vcmask 654336
          %v481 = vsel %vm480, %v479, %v434
          %vm482 = vcmask 785408
          %v483 = vsel %vm482, %v481, %v438
          %vm484 = vcmask 916480
          %v485 = vsel %vm484, %v483, %v442
          %v486 = vsel %vm472, %v388, %v446
          %v487 = vsel %vm474, %v486, %v450
          %v488 = vsel %vm476, %v487, %v454
          %v489 = vsel %vm478, %v488, %v458
          %v490 = vsel %vm480, %v489, %v462
          %v491 = vsel %vm482, %v490, %v466
          %v492 = vsel %vm484, %v491, %v470
          %493 = vst [vmem:[#allocation3] sm:$0xf] %v485
          %494 = vst [vmem:[#allocation3 + $0x8] sm:$0xf] %v492
          %v495 = vld [vmem:[#allocation2] sm:$0xff]
          %v496 = vld [vmem:[#allocation2 + $0x8] sm:$0xff]
          %v497 = vld [vmem:[#allocation2 + $0x18] sm:$0xff]
          %v498 = vld [vmem:[#allocation2 + $0x20] sm:$0xff]
          %v499 = vld [vmem:[#allocation2 + $0x30] sm:$0xff]
          %v500 = vld [vmem:[#allocation2 + $0x38] sm:$0xff]
          %v501 = vld [vmem:[#allocation2 + $0x48] sm:$0xff]
          %v502 = vld [vmem:[#allocation2 + $0x50] sm:$0xff]
          %511 = vrot.lane.b32.xlu0 %v495, 127
          %v512 = vpop.permute.xlu0 %511
          %513 = vrot.lane.b32.xlu0 %v496, 127
          %v514 = vpop.permute.xlu0 %513
          %515 = vrot.lane.b32.xlu0 %v497, 127
          %v516 = vpop.permute.xlu0 %515
          %517 = vrot.lane.b32.xlu0 %v498, 127
          %v518 = vpop.permute.xlu0 %517
          %519 = vrot.lane.b32.xlu0 %v499, 127
          %v520 = vpop.permute.xlu0 %519
          %521 = vrot.lane.b32.xlu0 %v500, 127
          %v522 = vpop.permute.xlu0 %521
          %523 = vrot.lane.b32.xlu0 %v501, 127
          %v524 = vpop.permute.xlu0 %523
          %525 = vrot.lane.b32.xlu0 %v502, 127
          %v526 = vpop.permute.xlu0 %525
          %v535 = vcombine.low %v512, %v520
          %v536 = vcombine.high %v512, %v520
          %v538 = vunpack.c.l.s4 1983009808
          %v539 = vunpack.c.0.s8 %v538
          %v540 = vlaneseq
          %v541 = vshrl.u32 %v540, 7
          %v542 = vsub.s32 %v539, %v541
          %v543 = vrot.slane %v535, %v542
          %v545 = vunpack.c.l.s4 1983009808
          %v546 = vunpack.c.0.s8 %v545
          %v547 = vlaneseq
          %v548 = vshrl.u32 %v547, 7
          %v549 = vsub.s32 %v546, %v548
          %v550 = vrot.slane %v536, %v549
          %v551 = vcombine.low %v516, %v524
          %v552 = vcombine.high %v516, %v524
          %v554 = vunpack.c.l.s4 1983009808
          %v555 = vunpack.c.0.s8 %v554
          %v556 = vlaneseq
          %v557 = vshrl.u32 %v556, 7
          %v558 = vsub.s32 %v555, %v557
          %v559 = vrot.slane %v551, %v558
          %v561 = vunpack.c.l.s4 1983009808
          %v562 = vunpack.c.0.s8 %v561
          %v563 = vlaneseq
          %v564 = vshrl.u32 %v563, 7
          %v565 = vsub.s32 %v562, %v564
          %v566 = vrot.slane %v552, %v565
          %v567 = vcombine.low %v543, %v559
          %v568 = vcombine.high %v543, %v559
          %v570 = vunpack.c.l.s4 1934713408
          %v571 = vunpack.c.0.s8 %v570
          %v572 = vlaneseq
          %v573 = vshrl.u32 %v572, 7
          %v574 = vsub.s32 %v571, %v573
          %v575 = vrot.slane %v567, %v574
          %v577 = vunpack.c.l.s4 1934713408
          %v578 = vunpack.c.0.s8 %v577
          %v579 = vlaneseq
          %v580 = vshrl.u32 %v579, 7
          %v581 = vsub.s32 %v578, %v580
          %v582 = vrot.slane %v568, %v581
          %v583 = vcombine.low %v550, %v566
          %v584 = vcombine.high %v550, %v566
          %v586 = vunpack.c.l.s4 1934713408
          %v587 = vunpack.c.0.s8 %v586
          %v588 = vlaneseq
          %v589 = vshrl.u32 %v588, 7
          %v590 = vsub.s32 %v587, %v589
          %v591 = vrot.slane %v583, %v590
          %v593 = vunpack.c.l.s4 1934713408
          %v594 = vunpack.c.0.s8 %v593
          %v595 = vlaneseq
          %v596 = vshrl.u32 %v595, 7
          %v597 = vsub.s32 %v594, %v596
          %v598 = vrot.slane %v584, %v597
          %v599 = vcombine.high %v575, 0.0
          %v600 = vcombine.high %v582, 0.0
          %v601 = vcombine.high %v591, 0.0
          %v602 = vcombine.high %v598, 0.0
          %v603 = vcombine.low %v514, %v522
          %v604 = vcombine.high %v514, %v522
          %v606 = vunpack.c.l.s4 1983009808
          %v607 = vunpack.c.0.s8 %v606
          %v608 = vlaneseq
          %v609 = vshrl.u32 %v608, 7
          %v610 = vsub.s32 %v607, %v609
          %v611 = vrot.slane %v603, %v610
          %v613 = vunpack.c.l.s4 1983009808
          %v614 = vunpack.c.0.s8 %v613
          %v615 = vlaneseq
          %v616 = vshrl.u32 %v615, 7
          %v617 = vsub.s32 %v614, %v616
          %v618 = vrot.slane %v604, %v617
          %v619 = vcombine.low %v518, %v526
          %v620 = vcombine.high %v518, %v526
          %v622 = vunpack.c.l.s4 1983009808
          %v623 = vunpack.c.0.s8 %v622
          %v624 = vlaneseq
          %v625 = vshrl.u32 %v624, 7
          %v626 = vsub.s32 %v623, %v625
          %v627 = vrot.slane %v619, %v626
          %v629 = vunpack.c.l.s4 1983009808
          %v630 = vunpack.c.0.s8 %v629
          %v631 = vlaneseq
          %v632 = vshrl.u32 %v631, 7
          %v633 = vsub.s32 %v630, %v632
          %v634 = vrot.slane %v620, %v633
          %v635 = vcombine.low %v611, %v627
          %v636 = vcombine.high %v611, %v627
          %v638 = vunpack.c.l.s4 1934713408
          %v639 = vunpack.c.0.s8 %v638
          %v640 = vlaneseq
          %v641 = vshrl.u32 %v640, 7
          %v642 = vsub.s32 %v639, %v641
          %v643 = vrot.slane %v635, %v642
          %v645 = vunpack.c.l.s4 1934713408
          %v646 = vunpack.c.0.s8 %v645
          %v647 = vlaneseq
          %v648 = vshrl.u32 %v647, 7
          %v649 = vsub.s32 %v646, %v648
          %v650 = vrot.slane %v636, %v649
          %v651 = vcombine.low %v618, %v634
          %v652 = vcombine.high %v618, %v634
          %v654 = vunpack.c.l.s4 1934713408
          %v655 = vunpack.c.0.s8 %v654
          %v656 = vlaneseq
          %v657 = vshrl.u32 %v656, 7
          %v658 = vsub.s32 %v655, %v657
          %v659 = vrot.slane %v651, %v658
          %v661 = vunpack.c.l.s4 1934713408
          %v662 = vunpack.c.0.s8 %v661
          %v663 = vlaneseq
          %v664 = vshrl.u32 %v663, 7
          %v665 = vsub.s32 %v662, %v664
          %v666 = vrot.slane %v652, %v665
          %v667 = vcombine.high %v643, 0.0
          %v668 = vcombine.high %v650, 0.0
          %v669 = vcombine.high %v659, 0.0
          %v670 = vcombine.high %v666, 0.0
          %672 = vrot.lane.b32.xlu0 %v599, 16
          %v673 = vpop.permute.xlu0 %672
          %676 = vrot.lane.b32.xlu0 %v582, 32
          %v677 = vpop.permute.xlu0 %676
          %680 = vrot.lane.b32.xlu0 %v600, 48
          %v681 = vpop.permute.xlu0 %680
          %684 = vrot.lane.b32.xlu0 %v591, 64
          %v685 = vpop.permute.xlu0 %684
          %688 = vrot.lane.b32.xlu0 %v601, 80
          %v689 = vpop.permute.xlu0 %688
          %692 = vrot.lane.b32.xlu0 %v598, 96
          %v693 = vpop.permute.xlu0 %692
          %696 = vrot.lane.b32.xlu0 %v602, 112
          %v697 = vpop.permute.xlu0 %696
          %700 = vrot.lane.b32.xlu0 %v667, 16
          %v701 = vpop.permute.xlu0 %700
          %704 = vrot.lane.b32.xlu0 %v650, 32
          %v705 = vpop.permute.xlu0 %704
          %708 = vrot.lane.b32.xlu0 %v668, 48
          %v709 = vpop.permute.xlu0 %708
          %712 = vrot.lane.b32.xlu0 %v659, 64
          %v713 = vpop.permute.xlu0 %712
          %716 = vrot.lane.b32.xlu0 %v669, 80
          %v717 = vpop.permute.xlu0 %716
          %720 = vrot.lane.b32.xlu0 %v666, 96
          %v721 = vpop.permute.xlu0 %720
          %724 = vrot.lane.b32.xlu0 %v670, 112
          %v725 = vpop.permute.xlu0 %724
          %v727 = vsel %vm472, %v575, %v673
          %v728 = vsel %vm474, %v727, %v677
          %v729 = vsel %vm476, %v728, %v681
          %v730 = vsel %vm478, %v729, %v685
          %v731 = vsel %vm480, %v730, %v689
          %v732 = vsel %vm482, %v731, %v693
          %v733 = vsel %vm484, %v732, %v697
          %v734 = vsel %vm472, %v643, %v701
          %v735 = vsel %vm474, %v734, %v705
          %v736 = vsel %vm476, %v735, %v709
          %v737 = vsel %vm478, %v736, %v713
          %v738 = vsel %vm480, %v737, %v717
          %v739 = vsel %vm482, %v738, %v721
          %v740 = vsel %vm484, %v739, %v725
          %v743 = vrot.slane %v733, 4
          %v744 = vrot.slane %v740, 4
          %747 = vst [vmem:[#allocation3] sm:$0xf0] %v743
          %748 = vst [vmem:[#allocation3 + $0x8] sm:$0xf0] %v744
          %v749 = vld [vmem:[#allocation2] sm:$0xff]
          %v750 = vld [vmem:[#allocation2 + $0x8] sm:$0xff]
          %v751 = vld [vmem:[#allocation2 + $0x18] sm:$0xff]
          %v752 = vld [vmem:[#allocation2 + $0x20] sm:$0xff]
          %v753 = vld [vmem:[#allocation2 + $0x30] sm:$0xff]
          %v754 = vld [vmem:[#allocation2 + $0x38] sm:$0xff]
          %v755 = vld [vmem:[#allocation2 + $0x48] sm:$0xff]
          %v756 = vld [vmem:[#allocation2 + $0x50] sm:$0xff]
          %765 = vrot.lane.b32.xlu0 %v749, 126
          %v766 = vpop.permute.xlu0 %765
          %767 = vrot.lane.b32.xlu0 %v750, 126
          %v768 = vpop.permute.xlu0 %767
          %769 = vrot.lane.b32.xlu0 %v751, 126
          %v770 = vpop.permute.xlu0 %769
          %771 = vrot.lane.b32.xlu0 %v752, 126
          %v772 = vpop.permute.xlu0 %771
          %773 = vrot.lane.b32.xlu0 %v753, 126
          %v774 = vpop.permute.xlu0 %773
          %775 = vrot.lane.b32.xlu0 %v754, 126
          %v776 = vpop.permute.xlu0 %775
          %777 = vrot.lane.b32.xlu0 %v755, 126
          %v778 = vpop.permute.xlu0 %777
          %779 = vrot.lane.b32.xlu0 %v756, 126
          %v780 = vpop.permute.xlu0 %779
          %v789 = vcombine.low %v766, %v774
          %v790 = vcombine.high %v766, %v774
          %v792 = vunpack.c.l.s4 1983009808
          %v793 = vunpack.c.0.s8 %v792
          %v794 = vlaneseq
          %v795 = vshrl.u32 %v794, 7
          %v796 = vsub.s32 %v793, %v795
          %v797 = vrot.slane %v789, %v796
          %v799 = vunpack.c.l.s4 1983009808
          %v800 = vunpack.c.0.s8 %v799
          %v801 = vlaneseq
          %v802 = vshrl.u32 %v801, 7
          %v803 = vsub.s32 %v800, %v802
          %v804 = vrot.slane %v790, %v803
          %v805 = vcombine.low %v770, %v778
          %v806 = vcombine.high %v770, %v778
          %v808 = vunpack.c.l.s4 1983009808
          %v809 = vunpack.c.0.s8 %v808
          %v810 = vlaneseq
          %v811 = vshrl.u32 %v810, 7
          %v812 = vsub.s32 %v809, %v811
          %v813 = vrot.slane %v805, %v812
          %v815 = vunpack.c.l.s4 1983009808
          %v816 = vunpack.c.0.s8 %v815
          %v817 = vlaneseq
          %v818 = vshrl.u32 %v817, 7
          %v819 = vsub.s32 %v816, %v818
          %v820 = vrot.slane %v806, %v819
          %v821 = vcombine.low %v797, %v813
          %v822 = vcombine.high %v797, %v813
          %v824 = vunpack.c.l.s4 1934713408
          %v825 = vunpack.c.0.s8 %v824
          %v826 = vlaneseq
          %v827 = vshrl.u32 %v826, 7
          %v828 = vsub.s32 %v825, %v827
          %v829 = vrot.slane %v821, %v828
          %v831 = vunpack.c.l.s4 1934713408
          %v832 = vunpack.c.0.s8 %v831
          %v833 = vlaneseq
          %v834 = vshrl.u32 %v833, 7
          %v835 = vsub.s32 %v832, %v834
          %v836 = vrot.slane %v822, %v835
          %v837 = vcombine.low %v804, %v820
          %v838 = vcombine.high %v804, %v820
          %v840 = vunpack.c.l.s4 1934713408
          %v841 = vunpack.c.0.s8 %v840
          %v842 = vlaneseq
          %v843 = vshrl.u32 %v842, 7
          %v844 = vsub.s32 %v841, %v843
          %v845 = vrot.slane %v837, %v844
          %v847 = vunpack.c.l.s4 1934713408
          %v848 = vunpack.c.0.s8 %v847
          %v849 = vlaneseq
          %v850 = vshrl.u32 %v849, 7
          %v851 = vsub.s32 %v848, %v850
          %v852 = vrot.slane %v838, %v851
          %v853 = vcombine.high %v829, 0.0
          %v854 = vcombine.high %v836, 0.0
          %v855 = vcombine.high %v845, 0.0
          %v856 = vcombine.high %v852, 0.0
          %v857 = vcombine.low %v768, %v776
          %v858 = vcombine.high %v768, %v776
          %v860 = vunpack.c.l.s4 1983009808
          %v861 = vunpack.c.0.s8 %v860
          %v862 = vlaneseq
          %v863 = vshrl.u32 %v862, 7
          %v864 = vsub.s32 %v861, %v863
          %v865 = vrot.slane %v857, %v864
          %v867 = vunpack.c.l.s4 1983009808
          %v868 = vunpack.c.0.s8 %v867
          %v869 = vlaneseq
          %v870 = vshrl.u32 %v869, 7
          %v871 = vsub.s32 %v868, %v870
          %v872 = vrot.slane %v858, %v871
          %v873 = vcombine.low %v772, %v780
          %v874 = vcombine.high %v772, %v780
          %v876 = vunpack.c.l.s4 1983009808
          %v877 = vunpack.c.0.s8 %v876
          %v878 = vlaneseq
          %v879 = vshrl.u32 %v878, 7
          %v880 = vsub.s32 %v877, %v879
          %v881 = vrot.slane %v873, %v880
          %v883 = vunpack.c.l.s4 1983009808
          %v884 = vunpack.c.0.s8 %v883
          %v885 = vlaneseq
          %v886 = vshrl.u32 %v885, 7
          %v887 = vsub.s32 %v884, %v886
          %v888 = vrot.slane %v874, %v887
          %v889 = vcombine.low %v865, %v881
          %v890 = vcombine.high %v865, %v881
          %v892 = vunpack.c.l.s4 1934713408
          %v893 = vunpack.c.0.s8 %v892
          %v894 = vlaneseq
          %v895 = vshrl.u32 %v894, 7
          %v896 = vsub.s32 %v893, %v895
          %v897 = vrot.slane %v889, %v896
          %v899 = vunpack.c.l.s4 1934713408
          %v900 = vunpack.c.0.s8 %v899
          %v901 = vlaneseq
          %v902 = vshrl.u32 %v901, 7
          %v903 = vsub.s32 %v900, %v902
          %v904 = vrot.slane %v890, %v903
          %v905 = vcombine.low %v872, %v888
          %v906 = vcombine.high %v872, %v888
          %v908 = vunpack.c.l.s4 1934713408
          %v909 = vunpack.c.0.s8 %v908
          %v910 = vlaneseq
          %v911 = vshrl.u32 %v910, 7
          %v912 = vsub.s32 %v909, %v911
          %v913 = vrot.slane %v905, %v912
          %v915 = vunpack.c.l.s4 1934713408
          %v916 = vunpack.c.0.s8 %v915
          %v917 = vlaneseq
          %v918 = vshrl.u32 %v917, 7
          %v919 = vsub.s32 %v916, %v918
          %v920 = vrot.slane %v906, %v919
          %v921 = vcombine.high %v897, 0.0
          %v922 = vcombine.high %v904, 0.0
          %v923 = vcombine.high %v913, 0.0
          %v924 = vcombine.high %v920, 0.0
          %926 = vrot.lane.b32.xlu0 %v853, 16
          %v927 = vpop.permute.xlu0 %926
          %930 = vrot.lane.b32.xlu0 %v836, 32
          %v931 = vpop.permute.xlu0 %930
          %934 = vrot.lane.b32.xlu0 %v854, 48
          %v935 = vpop.permute.xlu0 %934
          %938 = vrot.lane.b32.xlu0 %v845, 64
          %v939 = vpop.permute.xlu0 %938
          %942 = vrot.lane.b32.xlu0 %v855, 80
          %v943 = vpop.permute.xlu0 %942
          %946 = vrot.lane.b32.xlu0 %v852, 96
          %v947 = vpop.permute.xlu0 %946
          %950 = vrot.lane.b32.xlu0 %v856, 112
          %v951 = vpop.permute.xlu0 %950
          %954 = vrot.lane.b32.xlu0 %v921, 16
          %v955 = vpop.permute.xlu0 %954
          %958 = vrot.lane.b32.xlu0 %v904, 32
          %v959 = vpop.permute.xlu0 %958
          %962 = vrot.lane.b32.xlu0 %v922, 48
          %v963 = vpop.permute.xlu0 %962
          %966 = vrot.lane.b32.xlu0 %v913, 64
          %v967 = vpop.permute.xlu0 %966
          %970 = vrot.lane.b32.xlu0 %v923, 80
          %v971 = vpop.permute.xlu0 %970
          %974 = vrot.lane.b32.xlu0 %v920, 96
          %v975 = vpop.permute.xlu0 %974
          %978 = vrot.lane.b32.xlu0 %v924, 112
          %v979 = vpop.permute.xlu0 %978
          %v981 = vsel %vm472, %v829, %v927
          %v982 = vsel %vm474, %v981, %v931
          %v983 = vsel %vm476, %v982, %v935
          %v984 = vsel %vm478, %v983, %v939
          %v985 = vsel %vm480, %v984, %v943
          %v986 = vsel %vm482, %v985, %v947
          %v987 = vsel %vm484, %v986, %v951
          %v988 = vsel %vm472, %v897, %v955
          %v989 = vsel %vm474, %v988, %v959
          %v990 = vsel %vm476, %v989, %v963
          %v991 = vsel %vm478, %v990, %v967
          %v992 = vsel %vm480, %v991, %v971
          %v993 = vsel %vm482, %v992, %v975
          %v994 = vsel %vm484, %v993, %v979
          %995 = vst [vmem:[#allocation3 + $0x10] sm:$0xf] %v987
          %996 = vst [vmem:[#allocation3 + $0x18] sm:$0xf] %v994
          %v997 = vld [vmem:[#allocation2 + $0x1] sm:$0xff]
          %v998 = vld [vmem:[#allocation2 + $0x9] sm:$0xff]
          %v999 = vld [vmem:[#allocation2 + $0x19] sm:$0xff]
          %v1000 = vld [vmem:[#allocation2 + $0x21] sm:$0xff]
          %v1001 = vld [vmem:[#allocation2 + $0x31] sm:$0xff]
          %v1002 = vld [vmem:[#allocation2 + $0x39] sm:$0xff]
          %v1003 = vld [vmem:[#allocation2 + $0x49] sm:$0xff]
          %v1004 = vld [vmem:[#allocation2 + $0x51] sm:$0xff]
          %v1005 = vcombine.low %v997, %v1001
          %v1006 = vcombine.high %v997, %v1001
          %v1008 = vunpack.c.l.s4 1983009808
          %v1009 = vunpack.c.0.s8 %v1008
          %v1010 = vlaneseq
          %v1011 = vshrl.u32 %v1010, 7
          %v1012 = vsub.s32 %v1009, %v1011
          %v1013 = vrot.slane %v1005, %v1012
          %v1015 = vunpack.c.l.s4 1983009808
          %v1016 = vunpack.c.0.s8 %v1015
          %v1017 = vlaneseq
          %v1018 = vshrl.u32 %v1017, 7
          %v1019 = vsub.s32 %v1016, %v1018
          %v1020 = vrot.slane %v1006, %v1019
          %v1021 = vcombine.low %v999, %v1003
          %v1022 = vcombine.high %v999, %v1003
          %v1024 = vunpack.c.l.s4 1983009808
          %v1025 = vunpack.c.0.s8 %v1024
          %v1026 = vlaneseq
          %v1027 = vshrl.u32 %v1026, 7
          %v1028 = vsub.s32 %v1025, %v1027
          %v1029 = vrot.slane %v1021, %v1028
          %v1031 = vunpack.c.l.s4 1983009808
          %v1032 = vunpack.c.0.s8 %v1031
          %v1033 = vlaneseq
          %v1034 = vshrl.u32 %v1033, 7
          %v1035 = vsub.s32 %v1032, %v1034
          %v1036 = vrot.slane %v1022, %v1035
          %v1037 = vcombine.low %v1013, %v1029
          %v1038 = vcombine.high %v1013, %v1029
          %v1040 = vunpack.c.l.s4 1934713408
          %v1041 = vunpack.c.0.s8 %v1040
          %v1042 = vlaneseq
          %v1043 = vshrl.u32 %v1042, 7
          %v1044 = vsub.s32 %v1041, %v1043
          %v1045 = vrot.slane %v1037, %v1044
          %v1047 = vunpack.c.l.s4 1934713408
          %v1048 = vunpack.c.0.s8 %v1047
          %v1049 = vlaneseq
          %v1050 = vshrl.u32 %v1049, 7
          %v1051 = vsub.s32 %v1048, %v1050
          %v1052 = vrot.slane %v1038, %v1051
          %v1053 = vcombine.low %v1020, %v1036
          %v1054 = vcombine.high %v1020, %v1036
          %v1056 = vunpack.c.l.s4 1934713408
          %v1057 = vunpack.c.0.s8 %v1056
          %v1058 = vlaneseq
          %v1059 = vshrl.u32 %v1058, 7
          %v1060 = vsub.s32 %v1057, %v1059
          %v1061 = vrot.slane %v1053, %v1060
          %v1063 = vunpack.c.l.s4 1934713408
          %v1064 = vunpack.c.0.s8 %v1063
          %v1065 = vlaneseq
          %v1066 = vshrl.u32 %v1065, 7
          %v1067 = vsub.s32 %v1064, %v1066
          %v1068 = vrot.slane %v1054, %v1067
          %v1069 = vcombine.high %v1045, 0.0
          %v1070 = vcombine.high %v1052, 0.0
          %v1071 = vcombine.high %v1061, 0.0
          %v1072 = vcombine.high %v1068, 0.0
          %v1073 = vcombine.low %v998, %v1002
          %v1074 = vcombine.high %v998, %v1002
          %v1076 = vunpack.c.l.s4 1983009808
          %v1077 = vunpack.c.0.s8 %v1076
          %v1078 = vlaneseq
          %v1079 = vshrl.u32 %v1078, 7
          %v1080 = vsub.s32 %v1077, %v1079
          %v1081 = vrot.slane %v1073, %v1080
          %v1083 = vunpack.c.l.s4 1983009808
          %v1084 = vunpack.c.0.s8 %v1083
          %v1085 = vlaneseq
          %v1086 = vshrl.u32 %v1085, 7
          %v1087 = vsub.s32 %v1084, %v1086
          %v1088 = vrot.slane %v1074, %v1087
          %v1089 = vcombine.low %v1000, %v1004
          %v1090 = vcombine.high %v1000, %v1004
          %v1092 = vunpack.c.l.s4 1983009808
          %v1093 = vunpack.c.0.s8 %v1092
          %v1094 = vlaneseq
          %v1095 = vshrl.u32 %v1094, 7
          %v1096 = vsub.s32 %v1093, %v1095
          %v1097 = vrot.slane %v1089, %v1096
          %v1099 = vunpack.c.l.s4 1983009808
          %v1100 = vunpack.c.0.s8 %v1099
          %v1101 = vlaneseq
          %v1102 = vshrl.u32 %v1101, 7
          %v1103 = vsub.s32 %v1100, %v1102
          %v1104 = vrot.slane %v1090, %v1103
          %v1105 = vcombine.low %v1081, %v1097
          %v1106 = vcombine.high %v1081, %v1097
          %v1108 = vunpack.c.l.s4 1934713408
          %v1109 = vunpack.c.0.s8 %v1108
          %v1110 = vlaneseq
          %v1111 = vshrl.u32 %v1110, 7
          %v1112 = vsub.s32 %v1109, %v1111
          %v1113 = vrot.slane %v1105, %v1112
          %v1115 = vunpack.c.l.s4 1934713408
          %v1116 = vunpack.c.0.s8 %v1115
          %v1117 = vlaneseq
          %v1118 = vshrl.u32 %v1117, 7
          %v1119 = vsub.s32 %v1116, %v1118
          %v1120 = vrot.slane %v1106, %v1119
          %v1121 = vcombine.low %v1088, %v1104
          %v1122 = vcombine.high %v1088, %v1104
          %v1124 = vunpack.c.l.s4 1934713408
          %v1125 = vunpack.c.0.s8 %v1124
          %v1126 = vlaneseq
          %v1127 = vshrl.u32 %v1126, 7
          %v1128 = vsub.s32 %v1125, %v1127
          %v1129 = vrot.slane %v1121, %v1128
          %v1131 = vunpack.c.l.s4 1934713408
          %v1132 = vunpack.c.0.s8 %v1131
          %v1133 = vlaneseq
          %v1134 = vshrl.u32 %v1133, 7
          %v1135 = vsub.s32 %v1132, %v1134
          %v1136 = vrot.slane %v1122, %v1135
          %v1137 = vcombine.high %v1113, 0.0
          %v1138 = vcombine.high %v1120, 0.0
          %v1139 = vcombine.high %v1129, 0.0
          %v1140 = vcombine.high %v1136, 0.0
          %1142 = vrot.lane.b32.xlu0 %v1069, 16
          %v1143 = vpop.permute.xlu0 %1142
          %1146 = vrot.lane.b32.xlu0 %v1052, 32
          %v1147 = vpop.permute.xlu0 %1146
          %1150 = vrot.lane.b32.xlu0 %v1070, 48
          %v1151 = vpop.permute.xlu0 %1150
          %1154 = vrot.lane.b32.xlu0 %v1061, 64
          %v1155 = vpop.permute.xlu0 %1154
          %1158 = vrot.lane.b32.xlu0 %v1071, 80
          %v1159 = vpop.permute.xlu0 %1158
          %1162 = vrot.lane.b32.xlu0 %v1068, 96
          %v1163 = vpop.permute.xlu0 %1162
          %1166 = vrot.lane.b32.xlu0 %v1072, 112
          %v1167 = vpop.permute.xlu0 %1166
          %1170 = vrot.lane.b32.xlu0 %v1137, 16
          %v1171 = vpop.permute.xlu0 %1170
          %1174 = vrot.lane.b32.xlu0 %v1120, 32
          %v1175 = vpop.permute.xlu0 %1174
          %1178 = vrot.lane.b32.xlu0 %v1138, 48
          %v1179 = vpop.permute.xlu0 %1178
          %1182 = vrot.lane.b32.xlu0 %v1129, 64
          %v1183 = vpop.permute.xlu0 %1182
          %1186 = vrot.lane.b32.xlu0 %v1139, 80
          %v1187 = vpop.permute.xlu0 %1186
          %1190 = vrot.lane.b32.xlu0 %v1136, 96
          %v1191 = vpop.permute.xlu0 %1190
          %1194 = vrot.lane.b32.xlu0 %v1140, 112
          %v1195 = vpop.permute.xlu0 %1194
          %v1197 = vsel %vm472, %v1045, %v1143
          %v1198 = vsel %vm474, %v1197, %v1147
          %v1199 = vsel %vm476, %v1198, %v1151
          %v1200 = vsel %vm478, %v1199, %v1155
          %v1201 = vsel %vm480, %v1200, %v1159
          %v1202 = vsel %vm482, %v1201, %v1163
          %v1203 = vsel %vm484, %v1202, %v1167
          %v1204 = vsel %vm472, %v1113, %v1171
          %v1205 = vsel %vm474, %v1204, %v1175
          %v1206 = vsel %vm476, %v1205, %v1179
          %v1207 = vsel %vm478, %v1206, %v1183
          %v1208 = vsel %vm480, %v1207, %v1187
          %v1209 = vsel %vm482, %v1208, %v1191
          %v1210 = vsel %vm484, %v1209, %v1195
          %v1213 = vrot.slane %v1203, 4
          %v1214 = vrot.slane %v1210, 4
          %1217 = vst [vmem:[#allocation3 + $0x10] sm:$0xf0] %v1213
          %1218 = vst [vmem:[#allocation3 + $0x18] sm:$0xf0] %v1214
          %v1219 = vld [vmem:[#allocation2 + $0x1] sm:$0xff]
          %v1220 = vld [vmem:[#allocation2 + $0x9] sm:$0xff]
          %v1221 = vld [vmem:[#allocation2 + $0x19] sm:$0xff]
          %v1222 = vld [vmem:[#allocation2 + $0x21] sm:$0xff]
          %v1223 = vld [vmem:[#allocation2 + $0x31] sm:$0xff]
          %v1224 = vld [vmem:[#allocation2 + $0x39] sm:$0xff]
          %v1225 = vld [vmem:[#allocation2 + $0x49] sm:$0xff]
          %v1226 = vld [vmem:[#allocation2 + $0x51] sm:$0xff]
          %1235 = vrot.lane.b32.xlu0 %v1219, 127
          %v1236 = vpop.permute.xlu0 %1235
          %1237 = vrot.lane.b32.xlu0 %v1220, 127
          %v1238 = vpop.permute.xlu0 %1237
          %1239 = vrot.lane.b32.xlu0 %v1221, 127
          %v1240 = vpop.permute.xlu0 %1239
          %1241 = vrot.lane.b32.xlu0 %v1222, 127
          %v1242 = vpop.permute.xlu0 %1241
          %1243 = vrot.lane.b32.xlu0 %v1223, 127
          %v1244 = vpop.permute.xlu0 %1243
          %1245 = vrot.lane.b32.xlu0 %v1224, 127
          %v1246 = vpop.permute.xlu0 %1245
          %1247 = vrot.lane.b32.xlu0 %v1225, 127
          %v1248 = vpop.permute.xlu0 %1247
          %1249 = vrot.lane.b32.xlu0 %v1226, 127
          %v1250 = vpop.permute.xlu0 %1249
          %v1259 = vcombine.low %v1236, %v1244
          %v1260 = vcombine.high %v1236, %v1244
          %v1262 = vunpack.c.l.s4 1983009808
          %v1263 = vunpack.c.0.s8 %v1262
          %v1264 = vlaneseq
          %v1265 = vshrl.u32 %v1264, 7
          %v1266 = vsub.s32 %v1263, %v1265
          %v1267 = vrot.slane %v1259, %v1266
          %v1269 = vunpack.c.l.s4 1983009808
          %v1270 = vunpack.c.0.s8 %v1269
          %v1271 = vlaneseq
          %v1272 = vshrl.u32 %v1271, 7
          %v1273 = vsub.s32 %v1270, %v1272
          %v1274 = vrot.slane %v1260, %v1273
          %v1275 = vcombine.low %v1240, %v1248
          %v1276 = vcombine.high %v1240, %v1248
          %v1278 = vunpack.c.l.s4 1983009808
          %v1279 = vunpack.c.0.s8 %v1278
          %v1280 = vlaneseq
          %v1281 = vshrl.u32 %v1280, 7
          %v1282 = vsub.s32 %v1279, %v1281
          %v1283 = vrot.slane %v1275, %v1282
          %v1285 = vunpack.c.l.s4 1983009808
          %v1286 = vunpack.c.0.s8 %v1285
          %v1287 = vlaneseq
          %v1288 = vshrl.u32 %v1287, 7
          %v1289 = vsub.s32 %v1286, %v1288
          %v1290 = vrot.slane %v1276, %v1289
          %v1291 = vcombine.low %v1267, %v1283
          %v1292 = vcombine.high %v1267, %v1283
          %v1294 = vunpack.c.l.s4 1934713408
          %v1295 = vunpack.c.0.s8 %v1294
          %v1296 = vlaneseq
          %v1297 = vshrl.u32 %v1296, 7
          %v1298 = vsub.s32 %v1295, %v1297
          %v1299 = vrot.slane %v1291, %v1298
          %v1301 = vunpack.c.l.s4 1934713408
          %v1302 = vunpack.c.0.s8 %v1301
          %v1303 = vlaneseq
          %v1304 = vshrl.u32 %v1303, 7
          %v1305 = vsub.s32 %v1302, %v1304
          %v1306 = vrot.slane %v1292, %v1305
          %v1307 = vcombine.low %v1274, %v1290
          %v1308 = vcombine.high %v1274, %v1290
          %v1310 = vunpack.c.l.s4 1934713408
          %v1311 = vunpack.c.0.s8 %v1310
          %v1312 = vlaneseq
          %v1313 = vshrl.u32 %v1312, 7
          %v1314 = vsub.s32 %v1311, %v1313
          %v1315 = vrot.slane %v1307, %v1314
          %v1317 = vunpack.c.l.s4 1934713408
          %v1318 = vunpack.c.0.s8 %v1317
          %v1319 = vlaneseq
          %v1320 = vshrl.u32 %v1319, 7
          %v1321 = vsub.s32 %v1318, %v1320
          %v1322 = vrot.slane %v1308, %v1321
          %v1323 = vcombine.high %v1299, 0.0
          %v1324 = vcombine.high %v1306, 0.0
          %v1325 = vcombine.high %v1315, 0.0
          %v1326 = vcombine.high %v1322, 0.0
          %v1327 = vcombine.low %v1238, %v1246
          %v1328 = vcombine.high %v1238, %v1246
          %v1330 = vunpack.c.l.s4 1983009808
          %v1331 = vunpack.c.0.s8 %v1330
          %v1332 = vlaneseq
          %v1333 = vshrl.u32 %v1332, 7
          %v1334 = vsub.s32 %v1331, %v1333
          %v1335 = vrot.slane %v1327, %v1334
          %v1337 = vunpack.c.l.s4 1983009808
          %v1338 = vunpack.c.0.s8 %v1337
          %v1339 = vlaneseq
          %v1340 = vshrl.u32 %v1339, 7
          %v1341 = vsub.s32 %v1338, %v1340
          %v1342 = vrot.slane %v1328, %v1341
          %v1343 = vcombine.low %v1242, %v1250
          %v1344 = vcombine.high %v1242, %v1250
          %v1346 = vunpack.c.l.s4 1983009808
          %v1347 = vunpack.c.0.s8 %v1346
          %v1348 = vlaneseq
          %v1349 = vshrl.u32 %v1348, 7
          %v1350 = vsub.s32 %v1347, %v1349
          %v1351 = vrot.slane %v1343, %v1350
          %v1353 = vunpack.c.l.s4 1983009808
          %v1354 = vunpack.c.0.s8 %v1353
          %v1355 = vlaneseq
          %v1356 = vshrl.u32 %v1355, 7
          %v1357 = vsub.s32 %v1354, %v1356
          %v1358 = vrot.slane %v1344, %v1357
          %v1359 = vcombine.low %v1335, %v1351
          %v1360 = vcombine.high %v1335, %v1351
          %v1362 = vunpack.c.l.s4 1934713408
          %v1363 = vunpack.c.0.s8 %v1362
          %v1364 = vlaneseq
          %v1365 = vshrl.u32 %v1364, 7
          %v1366 = vsub.s32 %v1363, %v1365
          %v1367 = vrot.slane %v1359, %v1366
          %v1369 = vunpack.c.l.s4 1934713408
          %v1370 = vunpack.c.0.s8 %v1369
          %v1371 = vlaneseq
          %v1372 = vshrl.u32 %v1371, 7
          %v1373 = vsub.s32 %v1370, %v1372
          %v1374 = vrot.slane %v1360, %v1373
          %v1375 = vcombine.low %v1342, %v1358
          %v1376 = vcombine.high %v1342, %v1358
          %v1378 = vunpack.c.l.s4 1934713408
          %v1379 = vunpack.c.0.s8 %v1378
          %v1380 = vlaneseq
          %v1381 = vshrl.u32 %v1380, 7
          %v1382 = vsub.s32 %v1379, %v1381
          %v1383 = vrot.slane %v1375, %v1382
          %v1385 = vunpack.c.l.s4 1934713408
          %v1386 = vunpack.c.0.s8 %v1385
          %v1387 = vlaneseq
          %v1388 = vshrl.u32 %v1387, 7
          %v1389 = vsub.s32 %v1386, %v1388
          %v1390 = vrot.slane %v1376, %v1389
          %v1391 = vcombine.high %v1367, 0.0
          %v1392 = vcombine.high %v1374, 0.0
          %v1393 = vcombine.high %v1383, 0.0
          %v1394 = vcombine.high %v1390, 0.0
          %1396 = vrot.lane.b32.xlu0 %v1323, 16
          %v1397 = vpop.permute.xlu0 %1396
          %1400 = vrot.lane.b32.xlu0 %v1306, 32
          %v1401 = vpop.permute.xlu0 %1400
          %1404 = vrot.lane.b32.xlu0 %v1324, 48
          %v1405 = vpop.permute.xlu0 %1404
          %1408 = vrot.lane.b32.xlu0 %v1315, 64
          %v1409 = vpop.permute.xlu0 %1408
          %1412 = vrot.lane.b32.xlu0 %v1325, 80
          %v1413 = vpop.permute.xlu0 %1412
          %1416 = vrot.lane.b32.xlu0 %v1322, 96
          %v1417 = vpop.permute.xlu0 %1416
          %1420 = vrot.lane.b32.xlu0 %v1326, 112
          %v1421 = vpop.permute.xlu0 %1420
          %1424 = vrot.lane.b32.xlu0 %v1391, 16
          %v1425 = vpop.permute.xlu0 %1424
          %1428 = vrot.lane.b32.xlu0 %v1374, 32
          %v1429 = vpop.permute.xlu0 %1428
          %1432 = vrot.lane.b32.xlu0 %v1392, 48
          %v1433 = vpop.permute.xlu0 %1432
          %1436 = vrot.lane.b32.xlu0 %v1383, 64
          %v1437 = vpop.permute.xlu0 %1436
          %1440 = vrot.lane.b32.xlu0 %v1393, 80
          %v1441 = vpop.permute.xlu0 %1440
          %1444 = vrot.lane.b32.xlu0 %v1390, 96
          %v1445 = vpop.permute.xlu0 %1444
          %1448 = vrot.lane.b32.xlu0 %v1394, 112
          %v1449 = vpop.permute.xlu0 %1448
          %v1451 = vsel %vm472, %v1299, %v1397
          %v1452 = vsel %vm474, %v1451, %v1401
          %v1453 = vsel %vm476, %v1452, %v1405
          %v1454 = vsel %vm478, %v1453, %v1409
          %v1455 = vsel %vm480, %v1454, %v1413
          %v1456 = vsel %vm482, %v1455, %v1417
          %v1457 = vsel %vm484, %v1456, %v1421
          %v1458 = vsel %vm472, %v1367, %v1425
          %v1459 = vsel %vm474, %v1458, %v1429
          %v1460 = vsel %vm476, %v1459, %v1433
          %v1461 = vsel %vm478, %v1460, %v1437
          %v1462 = vsel %vm480, %v1461, %v1441
          %v1463 = vsel %vm482, %v1462, %v1445
          %v1464 = vsel %vm484, %v1463, %v1449
          %1465 = vst [vmem:[#allocation3 + $0x20] sm:$0xf] %v1457
          %1466 = vst [vmem:[#allocation3 + $0x28] sm:$0xf] %v1464
          %v1467 = vld [vmem:[#allocation2 + $0x1] sm:$0xff]
          %v1468 = vld [vmem:[#allocation2 + $0x9] sm:$0xff]
          %v1469 = vld [vmem:[#allocation2 + $0x19] sm:$0xff]
          %v1470 = vld [vmem:[#allocation2 + $0x21] sm:$0xff]
          %v1471 = vld [vmem:[#allocation2 + $0x31] sm:$0xff]
          %v1472 = vld [vmem:[#allocation2 + $0x39] sm:$0xff]
          %v1473 = vld [vmem:[#allocation2 + $0x49] sm:$0xff]
          %v1474 = vld [vmem:[#allocation2 + $0x51] sm:$0xff]
          %1483 = vrot.lane.b32.xlu0 %v1467, 126
          %v1484 = vpop.permute.xlu0 %1483
          %1485 = vrot.lane.b32.xlu0 %v1468, 126
          %v1486 = vpop.permute.xlu0 %1485
          %1487 = vrot.lane.b32.xlu0 %v1469, 126
          %v1488 = vpop.permute.xlu0 %1487
          %1489 = vrot.lane.b32.xlu0 %v1470, 126
          %v1490 = vpop.permute.xlu0 %1489
          %1491 = vrot.lane.b32.xlu0 %v1471, 126
          %v1492 = vpop.permute.xlu0 %1491
          %1493 = vrot.lane.b32.xlu0 %v1472, 126
          %v1494 = vpop.permute.xlu0 %1493
          %1495 = vrot.lane.b32.xlu0 %v1473, 126
          %v1496 = vpop.permute.xlu0 %1495
          %1497 = vrot.lane.b32.xlu0 %v1474, 126
          %v1498 = vpop.permute.xlu0 %1497
          %v1507 = vcombine.low %v1484, %v1492
          %v1508 = vcombine.high %v1484, %v1492
          %v1510 = vunpack.c.l.s4 1983009808
          %v1511 = vunpack.c.0.s8 %v1510
          %v1512 = vlaneseq
          %v1513 = vshrl.u32 %v1512, 7
          %v1514 = vsub.s32 %v1511, %v1513
          %v1515 = vrot.slane %v1507, %v1514
          %v1517 = vunpack.c.l.s4 1983009808
          %v1518 = vunpack.c.0.s8 %v1517
          %v1519 = vlaneseq
          %v1520 = vshrl.u32 %v1519, 7
          %v1521 = vsub.s32 %v1518, %v1520
          %v1522 = vrot.slane %v1508, %v1521
          %v1523 = vcombine.low %v1488, %v1496
          %v1524 = vcombine.high %v1488, %v1496
          %v1526 = vunpack.c.l.s4 1983009808
          %v1527 = vunpack.c.0.s8 %v1526
          %v1528 = vlaneseq
          %v1529 = vshrl.u32 %v1528, 7
          %v1530 = vsub.s32 %v1527, %v1529
          %v1531 = vrot.slane %v1523, %v1530
          %v1533 = vunpack.c.l.s4 1983009808
          %v1534 = vunpack.c.0.s8 %v1533
          %v1535 = vlaneseq
          %v1536 = vshrl.u32 %v1535, 7
          %v1537 = vsub.s32 %v1534, %v1536
          %v1538 = vrot.slane %v1524, %v1537
          %v1539 = vcombine.low %v1515, %v1531
          %v1540 = vcombine.high %v1515, %v1531
          %v1542 = vunpack.c.l.s4 1934713408
          %v1543 = vunpack.c.0.s8 %v1542
          %v1544 = vlaneseq
          %v1545 = vshrl.u32 %v1544, 7
          %v1546 = vsub.s32 %v1543, %v1545
          %v1547 = vrot.slane %v1539, %v1546
          %v1549 = vunpack.c.l.s4 1934713408
          %v1550 = vunpack.c.0.s8 %v1549
          %v1551 = vlaneseq
          %v1552 = vshrl.u32 %v1551, 7
          %v1553 = vsub.s32 %v1550, %v1552
          %v1554 = vrot.slane %v1540, %v1553
          %v1555 = vcombine.low %v1522, %v1538
          %v1556 = vcombine.high %v1522, %v1538
          %v1558 = vunpack.c.l.s4 1934713408
          %v1559 = vunpack.c.0.s8 %v1558
          %v1560 = vlaneseq
          %v1561 = vshrl.u32 %v1560, 7
          %v1562 = vsub.s32 %v1559, %v1561
          %v1563 = vrot.slane %v1555, %v1562
          %v1565 = vunpack.c.l.s4 1934713408
          %v1566 = vunpack.c.0.s8 %v1565
          %v1567 = vlaneseq
          %v1568 = vshrl.u32 %v1567, 7
          %v1569 = vsub.s32 %v1566, %v1568
          %v1570 = vrot.slane %v1556, %v1569
          %v1571 = vcombine.high %v1547, 0.0
          %v1572 = vcombine.high %v1554, 0.0
          %v1573 = vcombine.high %v1563, 0.0
          %v1574 = vcombine.high %v1570, 0.0
          %v1575 = vcombine.low %v1486, %v1494
          %v1576 = vcombine.high %v1486, %v1494
          %v1578 = vunpack.c.l.s4 1983009808
          %v1579 = vunpack.c.0.s8 %v1578
          %v1580 = vlaneseq
          %v1581 = vshrl.u32 %v1580, 7
          %v1582 = vsub.s32 %v1579, %v1581
          %v1583 = vrot.slane %v1575, %v1582
          %v1585 = vunpack.c.l.s4 1983009808
          %v1586 = vunpack.c.0.s8 %v1585
          %v1587 = vlaneseq
          %v1588 = vshrl.u32 %v1587, 7
          %v1589 = vsub.s32 %v1586, %v1588
          %v1590 = vrot.slane %v1576, %v1589
          %v1591 = vcombine.low %v1490, %v1498
          %v1592 = vcombine.high %v1490, %v1498
          %v1594 = vunpack.c.l.s4 1983009808
          %v1595 = vunpack.c.0.s8 %v1594
          %v1596 = vlaneseq
          %v1597 = vshrl.u32 %v1596, 7
          %v1598 = vsub.s32 %v1595, %v1597
          %v1599 = vrot.slane %v1591, %v1598
          %v1601 = vunpack.c.l.s4 1983009808
          %v1602 = vunpack.c.0.s8 %v1601
          %v1603 = vlaneseq
          %v1604 = vshrl.u32 %v1603, 7
          %v1605 = vsub.s32 %v1602, %v1604
          %v1606 = vrot.slane %v1592, %v1605
          %v1607 = vcombine.low %v1583, %v1599
          %v1608 = vcombine.high %v1583, %v1599
          %v1610 = vunpack.c.l.s4 1934713408
          %v1611 = vunpack.c.0.s8 %v1610
          %v1612 = vlaneseq
          %v1613 = vshrl.u32 %v1612, 7
          %v1614 = vsub.s32 %v1611, %v1613
          %v1615 = vrot.slane %v1607, %v1614
          %v1617 = vunpack.c.l.s4 1934713408
          %v1618 = vunpack.c.0.s8 %v1617
          %v1619 = vlaneseq
          %v1620 = vshrl.u32 %v1619, 7
          %v1621 = vsub.s32 %v1618, %v1620
          %v1622 = vrot.slane %v1608, %v1621
          %v1623 = vcombine.low %v1590, %v1606
          %v1624 = vcombine.high %v1590, %v1606
          %v1626 = vunpack.c.l.s4 1934713408
          %v1627 = vunpack.c.0.s8 %v1626
          %v1628 = vlaneseq
          %v1629 = vshrl.u32 %v1628, 7
          %v1630 = vsub.s32 %v1627, %v1629
          %v1631 = vrot.slane %v1623, %v1630
          %v1633 = vunpack.c.l.s4 1934713408
          %v1634 = vunpack.c.0.s8 %v1633
          %v1635 = vlaneseq
          %v1636 = vshrl.u32 %v1635, 7
          %v1637 = vsub.s32 %v1634, %v1636
          %v1638 = vrot.slane %v1624, %v1637
          %v1639 = vcombine.high %v1615, 0.0
          %v1640 = vcombine.high %v1622, 0.0
          %v1641 = vcombine.high %v1631, 0.0
          %v1642 = vcombine.high %v1638, 0.0
          %1644 = vrot.lane.b32.xlu0 %v1571, 16
          %v1645 = vpop.permute.xlu0 %1644
          %1648 = vrot.lane.b32.xlu0 %v1554, 32
          %v1649 = vpop.permute.xlu0 %1648
          %1652 = vrot.lane.b32.xlu0 %v1572, 48
          %v1653 = vpop.permute.xlu0 %1652
          %1656 = vrot.lane.b32.xlu0 %v1563, 64
          %v1657 = vpop.permute.xlu0 %1656
          %1660 = vrot.lane.b32.xlu0 %v1573, 80
          %v1661 = vpop.permute.xlu0 %1660
          %1664 = vrot.lane.b32.xlu0 %v1570, 96
          %v1665 = vpop.permute.xlu0 %1664
          %1668 = vrot.lane.b32.xlu0 %v1574, 112
          %v1669 = vpop.permute.xlu0 %1668
          %1672 = vrot.lane.b32.xlu0 %v1639, 16
          %v1673 = vpop.permute.xlu0 %1672
          %1676 = vrot.lane.b32.xlu0 %v1622, 32
          %v1677 = vpop.permute.xlu0 %1676
          %1680 = vrot.lane.b32.xlu0 %v1640, 48
          %v1681 = vpop.permute.xlu0 %1680
          %1684 = vrot.lane.b32.xlu0 %v1631, 64
          %v1685 = vpop.permute.xlu0 %1684
          %1688 = vrot.lane.b32.xlu0 %v1641, 80
          %v1689 = vpop.permute.xlu0 %1688
          %1692 = vrot.lane.b32.xlu0 %v1638, 96
          %v1693 = vpop.permute.xlu0 %1692
          %1696 = vrot.lane.b32.xlu0 %v1642, 112
          %v1697 = vpop.permute.xlu0 %1696
          %v1699 = vsel %vm472, %v1547, %v1645
          %v1700 = vsel %vm474, %v1699, %v1649
          %v1701 = vsel %vm476, %v1700, %v1653
          %v1702 = vsel %vm478, %v1701, %v1657
          %v1703 = vsel %vm480, %v1702, %v1661
          %v1704 = vsel %vm482, %v1703, %v1665
          %v1705 = vsel %vm484, %v1704, %v1669
          %v1706 = vsel %vm472, %v1615, %v1673
          %v1707 = vsel %vm474, %v1706, %v1677
          %v1708 = vsel %vm476, %v1707, %v1681
          %v1709 = vsel %vm478, %v1708, %v1685
          %v1710 = vsel %vm480, %v1709, %v1689
          %v1711 = vsel %vm482, %v1710, %v1693
          %v1712 = vsel %vm484, %v1711, %v1697
          %v1715 = vrot.slane %v1705, 4
          %v1716 = vrot.slane %v1712, 4
          %1719 = vst [vmem:[#allocation3 + $0x20] sm:$0xf0] %v1715
          %1720 = vst [vmem:[#allocation3 + $0x28] sm:$0xf0] %v1716
          %v1721 = vld [vmem:[#allocation2 + $0x2] sm:$0xff]
          %v1722 = vld [vmem:[#allocation2 + $0xa] sm:$0xff]
          %v1723 = vld [vmem:[#allocation2 + $0x1a] sm:$0xff]
          %v1724 = vld [vmem:[#allocation2 + $0x22] sm:$0xff]
          %v1725 = vld [vmem:[#allocation2 + $0x32] sm:$0xff]
          %v1726 = vld [vmem:[#allocation2 + $0x3a] sm:$0xff]
          %v1727 = vld [vmem:[#allocation2 + $0x4a] sm:$0xff]
          %v1728 = vld [vmem:[#allocation2 + $0x52] sm:$0xff]
          %v1729 = vcombine.low %v1721, %v1725
          %v1730 = vcombine.high %v1721, %v1725
          %v1732 = vunpack.c.l.s4 1983009808
          %v1733 = vunpack.c.0.s8 %v1732
          %v1734 = vlaneseq
          %v1735 = vshrl.u32 %v1734, 7
          %v1736 = vsub.s32 %v1733, %v1735
          %v1737 = vrot.slane %v1729, %v1736
          %v1739 = vunpack.c.l.s4 1983009808
          %v1740 = vunpack.c.0.s8 %v1739
          %v1741 = vlaneseq
          %v1742 = vshrl.u32 %v1741, 7
          %v1743 = vsub.s32 %v1740, %v1742
          %v1744 = vrot.slane %v1730, %v1743
          %v1745 = vcombine.low %v1723, %v1727
          %v1746 = vcombine.high %v1723, %v1727
          %v1748 = vunpack.c.l.s4 1983009808
          %v1749 = vunpack.c.0.s8 %v1748
          %v1750 = vlaneseq
          %v1751 = vshrl.u32 %v1750, 7
          %v1752 = vsub.s32 %v1749, %v1751
          %v1753 = vrot.slane %v1745, %v1752
          %v1755 = vunpack.c.l.s4 1983009808
          %v1756 = vunpack.c.0.s8 %v1755
          %v1757 = vlaneseq
          %v1758 = vshrl.u32 %v1757, 7
          %v1759 = vsub.s32 %v1756, %v1758
          %v1760 = vrot.slane %v1746, %v1759
          %v1761 = vcombine.low %v1737, %v1753
          %v1762 = vcombine.high %v1737, %v1753
          %v1764 = vunpack.c.l.s4 1934713408
          %v1765 = vunpack.c.0.s8 %v1764
          %v1766 = vlaneseq
          %v1767 = vshrl.u32 %v1766, 7
          %v1768 = vsub.s32 %v1765, %v1767
          %v1769 = vrot.slane %v1761, %v1768
          %v1771 = vunpack.c.l.s4 1934713408
          %v1772 = vunpack.c.0.s8 %v1771
          %v1773 = vlaneseq
          %v1774 = vshrl.u32 %v1773, 7
          %v1775 = vsub.s32 %v1772, %v1774
          %v1776 = vrot.slane %v1762, %v1775
          %v1777 = vcombine.low %v1744, %v1760
          %v1778 = vcombine.high %v1744, %v1760
          %v1780 = vunpack.c.l.s4 1934713408
          %v1781 = vunpack.c.0.s8 %v1780
          %v1782 = vlaneseq
          %v1783 = vshrl.u32 %v1782, 7
          %v1784 = vsub.s32 %v1781, %v1783
          %v1785 = vrot.slane %v1777, %v1784
          %v1787 = vunpack.c.l.s4 1934713408
          %v1788 = vunpack.c.0.s8 %v1787
          %v1789 = vlaneseq
          %v1790 = vshrl.u32 %v1789, 7
          %v1791 = vsub.s32 %v1788, %v1790
          %v1792 = vrot.slane %v1778, %v1791
          %v1793 = vcombine.high %v1769, 0.0
          %v1794 = vcombine.high %v1776, 0.0
          %v1795 = vcombine.high %v1785, 0.0
          %v1796 = vcombine.high %v1792, 0.0
          %v1797 = vcombine.low %v1722, %v1726
          %v1798 = vcombine.high %v1722, %v1726
          %v1800 = vunpack.c.l.s4 1983009808
          %v1801 = vunpack.c.0.s8 %v1800
          %v1802 = vlaneseq
          %v1803 = vshrl.u32 %v1802, 7
          %v1804 = vsub.s32 %v1801, %v1803
          %v1805 = vrot.slane %v1797, %v1804
          %v1807 = vunpack.c.l.s4 1983009808
          %v1808 = vunpack.c.0.s8 %v1807
          %v1809 = vlaneseq
          %v1810 = vshrl.u32 %v1809, 7
          %v1811 = vsub.s32 %v1808, %v1810
          %v1812 = vrot.slane %v1798, %v1811
          %v1813 = vcombine.low %v1724, %v1728
          %v1814 = vcombine.high %v1724, %v1728
          %v1816 = vunpack.c.l.s4 1983009808
          %v1817 = vunpack.c.0.s8 %v1816
          %v1818 = vlaneseq
          %v1819 = vshrl.u32 %v1818, 7
          %v1820 = vsub.s32 %v1817, %v1819
          %v1821 = vrot.slane %v1813, %v1820
          %v1823 = vunpack.c.l.s4 1983009808
          %v1824 = vunpack.c.0.s8 %v1823
          %v1825 = vlaneseq
          %v1826 = vshrl.u32 %v1825, 7
          %v1827 = vsub.s32 %v1824, %v1826
          %v1828 = vrot.slane %v1814, %v1827
          %v1829 = vcombine.low %v1805, %v1821
          %v1830 = vcombine.high %v1805, %v1821
          %v1832 = vunpack.c.l.s4 1934713408
          %v1833 = vunpack.c.0.s8 %v1832
          %v1834 = vlaneseq
          %v1835 = vshrl.u32 %v1834, 7
          %v1836 = vsub.s32 %v1833, %v1835
          %v1837 = vrot.slane %v1829, %v1836
          %v1839 = vunpack.c.l.s4 1934713408
          %v1840 = vunpack.c.0.s8 %v1839
          %v1841 = vlaneseq
          %v1842 = vshrl.u32 %v1841, 7
          %v1843 = vsub.s32 %v1840, %v1842
          %v1844 = vrot.slane %v1830, %v1843
          %v1845 = vcombine.low %v1812, %v1828
          %v1846 = vcombine.high %v1812, %v1828
          %v1848 = vunpack.c.l.s4 1934713408
          %v1849 = vunpack.c.0.s8 %v1848
          %v1850 = vlaneseq
          %v1851 = vshrl.u32 %v1850, 7
          %v1852 = vsub.s32 %v1849, %v1851
          %v1853 = vrot.slane %v1845, %v1852
          %v1855 = vunpack.c.l.s4 1934713408
          %v1856 = vunpack.c.0.s8 %v1855
          %v1857 = vlaneseq
          %v1858 = vshrl.u32 %v1857, 7
          %v1859 = vsub.s32 %v1856, %v1858
          %v1860 = vrot.slane %v1846, %v1859
          %v1861 = vcombine.high %v1837, 0.0
          %v1862 = vcombine.high %v1844, 0.0
          %v1863 = vcombine.high %v1853, 0.0
          %v1864 = vcombine.high %v1860, 0.0
          %1866 = vrot.lane.b32.xlu0 %v1793, 16
          %v1867 = vpop.permute.xlu0 %1866
          %1870 = vrot.lane.b32.xlu0 %v1776, 32
          %v1871 = vpop.permute.xlu0 %1870
          %1874 = vrot.lane.b32.xlu0 %v1794, 48
          %v1875 = vpop.permute.xlu0 %1874
          %1878 = vrot.lane.b32.xlu0 %v1785, 64
          %v1879 = vpop.permute.xlu0 %1878
          %1882 = vrot.lane.b32.xlu0 %v1795, 80
          %v1883 = vpop.permute.xlu0 %1882
          %1886 = vrot.lane.b32.xlu0 %v1792, 96
          %v1887 = vpop.permute.xlu0 %1886
          %1890 = vrot.lane.b32.xlu0 %v1796, 112
          %v1891 = vpop.permute.xlu0 %1890
          %1894 = vrot.lane.b32.xlu0 %v1861, 16
          %v1895 = vpop.permute.xlu0 %1894
          %1898 = vrot.lane.b32.xlu0 %v1844, 32
          %v1899 = vpop.permute.xlu0 %1898
          %1902 = vrot.lane.b32.xlu0 %v1862, 48
          %v1903 = vpop.permute.xlu0 %1902
          %1906 = vrot.lane.b32.xlu0 %v1853, 64
          %v1907 = vpop.permute.xlu0 %1906
          %1910 = vrot.lane.b32.xlu0 %v1863, 80
          %v1911 = vpop.permute.xlu0 %1910
          %1914 = vrot.lane.b32.xlu0 %v1860, 96
          %v1915 = vpop.permute.xlu0 %1914
          %1918 = vrot.lane.b32.xlu0 %v1864, 112
          %v1919 = vpop.permute.xlu0 %1918
          %v1921 = vsel %vm472, %v1769, %v1867
          %v1922 = vsel %vm474, %v1921, %v1871
          %v1923 = vsel %vm476, %v1922, %v1875
          %v1924 = vsel %vm478, %v1923, %v1879
          %v1925 = vsel %vm480, %v1924, %v1883
          %v1926 = vsel %vm482, %v1925, %v1887
          %v1927 = vsel %vm484, %v1926, %v1891
          %v1928 = vsel %vm472, %v1837, %v1895
          %v1929 = vsel %vm474, %v1928, %v1899
          %v1930 = vsel %vm476, %v1929, %v1903
          %v1931 = vsel %vm478, %v1930, %v1907
          %v1932 = vsel %vm480, %v1931, %v1911
          %v1933 = vsel %vm482, %v1932, %v1915
          %v1934 = vsel %vm484, %v1933, %v1919
          %1935 = vst [vmem:[#allocation3 + $0x30] sm:$0xf] %v1927
          %1936 = vst [vmem:[#allocation3 + $0x38] sm:$0xf] %v1934
          %v1937 = vld [vmem:[#allocation2 + $0x2] sm:$0xff]
          %v1938 = vld [vmem:[#allocation2 + $0xa] sm:$0xff]
          %v1939 = vld [vmem:[#allocation2 + $0x1a] sm:$0xff]
          %v1940 = vld [vmem:[#allocation2 + $0x22] sm:$0xff]
          %v1941 = vld [vmem:[#allocation2 + $0x32] sm:$0xff]
          %v1942 = vld [vmem:[#allocation2 + $0x3a] sm:$0xff]
          %v1943 = vld [vmem:[#allocation2 + $0x4a] sm:$0xff]
          %v1944 = vld [vmem:[#allocation2 + $0x52] sm:$0xff]
          %1953 = vrot.lane.b32.xlu0 %v1937, 127
          %v1954 = vpop.permute.xlu0 %1953
          %1955 = vrot.lane.b32.xlu0 %v1938, 127
          %v1956 = vpop.permute.xlu0 %1955
          %1957 = vrot.lane.b32.xlu0 %v1939, 127
          %v1958 = vpop.permute.xlu0 %1957
          %1959 = vrot.lane.b32.xlu0 %v1940, 127
          %v1960 = vpop.permute.xlu0 %1959
          %1961 = vrot.lane.b32.xlu0 %v1941, 127
          %v1962 = vpop.permute.xlu0 %1961
          %1963 = vrot.lane.b32.xlu0 %v1942, 127
          %v1964 = vpop.permute.xlu0 %1963
          %1965 = vrot.lane.b32.xlu0 %v1943, 127
          %v1966 = vpop.permute.xlu0 %1965
          %1967 = vrot.lane.b32.xlu0 %v1944, 127
          %v1968 = vpop.permute.xlu0 %1967
          %v1977 = vcombine.low %v1954, %v1962
          %v1978 = vcombine.high %v1954, %v1962
          %v1980 = vunpack.c.l.s4 1983009808
          %v1981 = vunpack.c.0.s8 %v1980
          %v1982 = vlaneseq
          %v1983 = vshrl.u32 %v1982, 7
          %v1984 = vsub.s32 %v1981, %v1983
          %v1985 = vrot.slane %v1977, %v1984
          %v1987 = vunpack.c.l.s4 1983009808
          %v1988 = vunpack.c.0.s8 %v1987
          %v1989 = vlaneseq
          %v1990 = vshrl.u32 %v1989, 7
          %v1991 = vsub.s32 %v1988, %v1990
          %v1992 = vrot.slane %v1978, %v1991
          %v1993 = vcombine.low %v1958, %v1966
          %v1994 = vcombine.high %v1958, %v1966
          %v1996 = vunpack.c.l.s4 1983009808
          %v1997 = vunpack.c.0.s8 %v1996
          %v1998 = vlaneseq
          %v1999 = vshrl.u32 %v1998, 7
          %v2000 = vsub.s32 %v1997, %v1999
          %v2001 = vrot.slane %v1993, %v2000
          %v2003 = vunpack.c.l.s4 1983009808
          %v2004 = vunpack.c.0.s8 %v2003
          %v2005 = vlaneseq
          %v2006 = vshrl.u32 %v2005, 7
          %v2007 = vsub.s32 %v2004, %v2006
          %v2008 = vrot.slane %v1994, %v2007
          %v2009 = vcombine.low %v1985, %v2001
          %v2010 = vcombine.high %v1985, %v2001
          %v2012 = vunpack.c.l.s4 1934713408
          %v2013 = vunpack.c.0.s8 %v2012
          %v2014 = vlaneseq
          %v2015 = vshrl.u32 %v2014, 7
          %v2016 = vsub.s32 %v2013, %v2015
          %v2017 = vrot.slane %v2009, %v2016
          %v2019 = vunpack.c.l.s4 1934713408
          %v2020 = vunpack.c.0.s8 %v2019
          %v2021 = vlaneseq
          %v2022 = vshrl.u32 %v2021, 7
          %v2023 = vsub.s32 %v2020, %v2022
          %v2024 = vrot.slane %v2010, %v2023
          %v2025 = vcombine.low %v1992, %v2008
          %v2026 = vcombine.high %v1992, %v2008
          %v2028 = vunpack.c.l.s4 1934713408
          %v2029 = vunpack.c.0.s8 %v2028
          %v2030 = vlaneseq
          %v2031 = vshrl.u32 %v2030, 7
          %v2032 = vsub.s32 %v2029, %v2031
          %v2033 = vrot.slane %v2025, %v2032
          %v2035 = vunpack.c.l.s4 1934713408
          %v2036 = vunpack.c.0.s8 %v2035
          %v2037 = vlaneseq
          %v2038 = vshrl.u32 %v2037, 7
          %v2039 = vsub.s32 %v2036, %v2038
          %v2040 = vrot.slane %v2026, %v2039
          %v2041 = vcombine.high %v2017, 0.0
          %v2042 = vcombine.high %v2024, 0.0
          %v2043 = vcombine.high %v2033, 0.0
          %v2044 = vcombine.high %v2040, 0.0
          %v2045 = vcombine.low %v1956, %v1964
          %v2046 = vcombine.high %v1956, %v1964
          %v2048 = vunpack.c.l.s4 1983009808
          %v2049 = vunpack.c.0.s8 %v2048
          %v2050 = vlaneseq
          %v2051 = vshrl.u32 %v2050, 7
          %v2052 = vsub.s32 %v2049, %v2051
          %v2053 = vrot.slane %v2045, %v2052
          %v2055 = vunpack.c.l.s4 1983009808
          %v2056 = vunpack.c.0.s8 %v2055
          %v2057 = vlaneseq
          %v2058 = vshrl.u32 %v2057, 7
          %v2059 = vsub.s32 %v2056, %v2058
          %v2060 = vrot.slane %v2046, %v2059
          %v2061 = vcombine.low %v1960, %v1968
          %v2062 = vcombine.high %v1960, %v1968
          %v2064 = vunpack.c.l.s4 1983009808
          %v2065 = vunpack.c.0.s8 %v2064
          %v2066 = vlaneseq
          %v2067 = vshrl.u32 %v2066, 7
          %v2068 = vsub.s32 %v2065, %v2067
          %v2069 = vrot.slane %v2061, %v2068
          %v2071 = vunpack.c.l.s4 1983009808
          %v2072 = vunpack.c.0.s8 %v2071
          %v2073 = vlaneseq
          %v2074 = vshrl.u32 %v2073, 7
          %v2075 = vsub.s32 %v2072, %v2074
          %v2076 = vrot.slane %v2062, %v2075
          %v2077 = vcombine.low %v2053, %v2069
          %v2078 = vcombine.high %v2053, %v2069
          %v2080 = vunpack.c.l.s4 1934713408
          %v2081 = vunpack.c.0.s8 %v2080
          %v2082 = vlaneseq
          %v2083 = vshrl.u32 %v2082, 7
          %v2084 = vsub.s32 %v2081, %v2083
          %v2085 = vrot.slane %v2077, %v2084
          %v2087 = vunpack.c.l.s4 1934713408
          %v2088 = vunpack.c.0.s8 %v2087
          %v2089 = vlaneseq
          %v2090 = vshrl.u32 %v2089, 7
          %v2091 = vsub.s32 %v2088, %v2090
          %v2092 = vrot.slane %v2078, %v2091
          %v2093 = vcombine.low %v2060, %v2076
          %v2094 = vcombine.high %v2060, %v2076
          %v2096 = vunpack.c.l.s4 1934713408
          %v2097 = vunpack.c.0.s8 %v2096
          %v2098 = vlaneseq
          %v2099 = vshrl.u32 %v2098, 7
          %v2100 = vsub.s32 %v2097, %v2099
          %v2101 = vrot.slane %v2093, %v2100
          %v2103 = vunpack.c.l.s4 1934713408
          %v2104 = vunpack.c.0.s8 %v2103
          %v2105 = vlaneseq
          %v2106 = vshrl.u32 %v2105, 7
          %v2107 = vsub.s32 %v2104, %v2106
          %v2108 = vrot.slane %v2094, %v2107
          %v2109 = vcombine.high %v2085, 0.0
          %v2110 = vcombine.high %v2092, 0.0
          %v2111 = vcombine.high %v2101, 0.0
          %v2112 = vcombine.high %v2108, 0.0
          %2114 = vrot.lane.b32.xlu0 %v2041, 16
          %v2115 = vpop.permute.xlu0 %2114
          %2118 = vrot.lane.b32.xlu0 %v2024, 32
          %v2119 = vpop.permute.xlu0 %2118
          %2122 = vrot.lane.b32.xlu0 %v2042, 48
          %v2123 = vpop.permute.xlu0 %2122
          %2126 = vrot.lane.b32.xlu0 %v2033, 64
          %v2127 = vpop.permute.xlu0 %2126
          %2130 = vrot.lane.b32.xlu0 %v2043, 80
          %v2131 = vpop.permute.xlu0 %2130
          %2134 = vrot.lane.b32.xlu0 %v2040, 96
          %v2135 = vpop.permute.xlu0 %2134
          %2138 = vrot.lane.b32.xlu0 %v2044, 112
          %v2139 = vpop.permute.xlu0 %2138
          %2142 = vrot.lane.b32.xlu0 %v2109, 16
          %v2143 = vpop.permute.xlu0 %2142
          %2146 = vrot.lane.b32.xlu0 %v2092, 32
          %v2147 = vpop.permute.xlu0 %2146
          %2150 = vrot.lane.b32.xlu0 %v2110, 48
          %v2151 = vpop.permute.xlu0 %2150
          %2154 = vrot.lane.b32.xlu0 %v2101, 64
          %v2155 = vpop.permute.xlu0 %2154
          %2158 = vrot.lane.b32.xlu0 %v2111, 80
          %v2159 = vpop.permute.xlu0 %2158
          %2162 = vrot.lane.b32.xlu0 %v2108, 96
          %v2163 = vpop.permute.xlu0 %2162
          %2166 = vrot.lane.b32.xlu0 %v2112, 112
          %v2167 = vpop.permute.xlu0 %2166
          %v2169 = vsel %vm472, %v2017, %v2115
          %v2170 = vsel %vm474, %v2169, %v2119
          %v2171 = vsel %vm476, %v2170, %v2123
          %v2172 = vsel %vm478, %v2171, %v2127
          %v2173 = vsel %vm480, %v2172, %v2131
          %v2174 = vsel %vm482, %v2173, %v2135
          %v2175 = vsel %vm484, %v2174, %v2139
          %v2176 = vsel %vm472, %v2085, %v2143
          %v2177 = vsel %vm474, %v2176, %v2147
          %v2178 = vsel %vm476, %v2177, %v2151
          %v2179 = vsel %vm478, %v2178, %v2155
          %v2180 = vsel %vm480, %v2179, %v2159
          %v2181 = vsel %vm482, %v2180, %v2163
          %v2182 = vsel %vm484, %v2181, %v2167
          %v2185 = vrot.slane %v2175, 4
          %v2186 = vrot.slane %v2182, 4
          %2189 = vst [vmem:[#allocation3 + $0x30] sm:$0xf0] %v2185
          %2190 = vst [vmem:[#allocation3 + $0x38] sm:$0xf0] %v2186
          %v2191 = vld [vmem:[#allocation2 + $0x2] sm:$0xff]
          %v2192 = vld [vmem:[#allocation2 + $0xa] sm:$0xff]
          %v2193 = vld [vmem:[#allocation2 + $0x1a] sm:$0xff]
          %v2194 = vld [vmem:[#allocation2 + $0x22] sm:$0xff]
          %v2195 = vld [vmem:[#allocation2 + $0x32] sm:$0xff]
          %v2196 = vld [vmem:[#allocation2 + $0x3a] sm:$0xff]
          %v2197 = vld [vmem:[#allocation2 + $0x4a] sm:$0xff]
          %v2198 = vld [vmem:[#allocation2 + $0x52] sm:$0xff]
          %2207 = vrot.lane.b32.xlu0 %v2191, 126
          %v2208 = vpop.permute.xlu0 %2207
          %2209 = vrot.lane.b32.xlu0 %v2192, 126
          %v2210 = vpop.permute.xlu0 %2209
          %2211 = vrot.lane.b32.xlu0 %v2193, 126
          %v2212 = vpop.permute.xlu0 %2211
          %2213 = vrot.lane.b32.xlu0 %v2194, 126
          %v2214 = vpop.permute.xlu0 %2213
          %2215 = vrot.lane.b32.xlu0 %v2195, 126
          %v2216 = vpop.permute.xlu0 %2215
          %2217 = vrot.lane.b32.xlu0 %v2196, 126
          %v2218 = vpop.permute.xlu0 %2217
          %2219 = vrot.lane.b32.xlu0 %v2197, 126
          %v2220 = vpop.permute.xlu0 %2219
          %2221 = vrot.lane.b32.xlu0 %v2198, 126
          %v2222 = vpop.permute.xlu0 %2221
          %v2231 = vcombine.low %v2208, %v2216
          %v2232 = vcombine.high %v2208, %v2216
          %v2234 = vunpack.c.l.s4 1983009808
          %v2235 = vunpack.c.0.s8 %v2234
          %v2236 = vlaneseq
          %v2237 = vshrl.u32 %v2236, 7
          %v2238 = vsub.s32 %v2235, %v2237
          %v2239 = vrot.slane %v2231, %v2238
          %v2241 = vunpack.c.l.s4 1983009808
          %v2242 = vunpack.c.0.s8 %v2241
          %v2243 = vlaneseq
          %v2244 = vshrl.u32 %v2243, 7
          %v2245 = vsub.s32 %v2242, %v2244
          %v2246 = vrot.slane %v2232, %v2245
          %v2247 = vcombine.low %v2212, %v2220
          %v2248 = vcombine.high %v2212, %v2220
          %v2250 = vunpack.c.l.s4 1983009808
          %v2251 = vunpack.c.0.s8 %v2250
          %v2252 = vlaneseq
          %v2253 = vshrl.u32 %v2252, 7
          %v2254 = vsub.s32 %v2251, %v2253
          %v2255 = vrot.slane %v2247, %v2254
          %v2257 = vunpack.c.l.s4 1983009808
          %v2258 = vunpack.c.0.s8 %v2257
          %v2259 = vlaneseq
          %v2260 = vshrl.u32 %v2259, 7
          %v2261 = vsub.s32 %v2258, %v2260
          %v2262 = vrot.slane %v2248, %v2261
          %v2263 = vcombine.low %v2239, %v2255
          %v2264 = vcombine.high %v2239, %v2255
          %v2266 = vunpack.c.l.s4 1934713408
          %v2267 = vunpack.c.0.s8 %v2266
          %v2268 = vlaneseq
          %v2269 = vshrl.u32 %v2268, 7
          %v2270 = vsub.s32 %v2267, %v2269
          %v2271 = vrot.slane %v2263, %v2270
          %v2273 = vunpack.c.l.s4 1934713408
          %v2274 = vunpack.c.0.s8 %v2273
          %v2275 = vlaneseq
          %v2276 = vshrl.u32 %v2275, 7
          %v2277 = vsub.s32 %v2274, %v2276
          %v2278 = vrot.slane %v2264, %v2277
          %v2279 = vcombine.low %v2246, %v2262
          %v2280 = vcombine.high %v2246, %v2262
          %v2282 = vunpack.c.l.s4 1934713408
          %v2283 = vunpack.c.0.s8 %v2282
          %v2284 = vlaneseq
          %v2285 = vshrl.u32 %v2284, 7
          %v2286 = vsub.s32 %v2283, %v2285
          %v2287 = vrot.slane %v2279, %v2286
          %v2289 = vunpack.c.l.s4 1934713408
          %v2290 = vunpack.c.0.s8 %v2289
          %v2291 = vlaneseq
          %v2292 = vshrl.u32 %v2291, 7
          %v2293 = vsub.s32 %v2290, %v2292
          %v2294 = vrot.slane %v2280, %v2293
          %v2295 = vcombine.high %v2271, 0.0
          %v2296 = vcombine.high %v2278, 0.0
          %v2297 = vcombine.high %v2287, 0.0
          %v2298 = vcombine.high %v2294, 0.0
          %v2299 = vcombine.low %v2210, %v2218
          %v2300 = vcombine.high %v2210, %v2218
          %v2302 = vunpack.c.l.s4 1983009808
          %v2303 = vunpack.c.0.s8 %v2302
          %v2304 = vlaneseq
          %v2305 = vshrl.u32 %v2304, 7
          %v2306 = vsub.s32 %v2303, %v2305
          %v2307 = vrot.slane %v2299, %v2306
          %v2309 = vunpack.c.l.s4 1983009808
          %v2310 = vunpack.c.0.s8 %v2309
          %v2311 = vlaneseq
          %v2312 = vshrl.u32 %v2311, 7
          %v2313 = vsub.s32 %v2310, %v2312
          %v2314 = vrot.slane %v2300, %v2313
          %v2315 = vcombine.low %v2214, %v2222
          %v2316 = vcombine.high %v2214, %v2222
          %v2318 = vunpack.c.l.s4 1983009808
          %v2319 = vunpack.c.0.s8 %v2318
          %v2320 = vlaneseq
          %v2321 = vshrl.u32 %v2320, 7
          %v2322 = vsub.s32 %v2319, %v2321
          %v2323 = vrot.slane %v2315, %v2322
          %v2325 = vunpack.c.l.s4 1983009808
          %v2326 = vunpack.c.0.s8 %v2325
          %v2327 = vlaneseq
          %v2328 = vshrl.u32 %v2327, 7
          %v2329 = vsub.s32 %v2326, %v2328
          %v2330 = vrot.slane %v2316, %v2329
          %v2331 = vcombine.low %v2307, %v2323
          %v2332 = vcombine.high %v2307, %v2323
          %v2334 = vunpack.c.l.s4 1934713408
          %v2335 = vunpack.c.0.s8 %v2334
          %v2336 = vlaneseq
          %v2337 = vshrl.u32 %v2336, 7
          %v2338 = vsub.s32 %v2335, %v2337
          %v2339 = vrot.slane %v2331, %v2338
          %v2341 = vunpack.c.l.s4 1934713408
          %v2342 = vunpack.c.0.s8 %v2341
          %v2343 = vlaneseq
          %v2344 = vshrl.u32 %v2343, 7
          %v2345 = vsub.s32 %v2342, %v2344
          %v2346 = vrot.slane %v2332, %v2345
          %v2347 = vcombine.low %v2314, %v2330
          %v2348 = vcombine.high %v2314, %v2330
          %v2350 = vunpack.c.l.s4 1934713408
          %v2351 = vunpack.c.0.s8 %v2350
          %v2352 = vlaneseq
          %v2353 = vshrl.u32 %v2352, 7
          %v2354 = vsub.s32 %v2351, %v2353
          %v2355 = vrot.slane %v2347, %v2354
          %v2357 = vunpack.c.l.s4 1934713408
          %v2358 = vunpack.c.0.s8 %v2357
          %v2359 = vlaneseq
          %v2360 = vshrl.u32 %v2359, 7
          %v2361 = vsub.s32 %v2358, %v2360
          %v2362 = vrot.slane %v2348, %v2361
          %v2363 = vcombine.high %v2339, 0.0
          %v2364 = vcombine.high %v2346, 0.0
          %v2365 = vcombine.high %v2355, 0.0
          %v2366 = vcombine.high %v2362, 0.0
          %2368 = vrot.lane.b32.xlu0 %v2295, 16
          %v2369 = vpop.permute.xlu0 %2368
          %2372 = vrot.lane.b32.xlu0 %v2278, 32
          %v2373 = vpop.permute.xlu0 %2372
          %2376 = vrot.lane.b32.xlu0 %v2296, 48
          %v2377 = vpop.permute.xlu0 %2376
          %2380 = vrot.lane.b32.xlu0 %v2287, 64
          %v2381 = vpop.permute.xlu0 %2380
          %2384 = vrot.lane.b32.xlu0 %v2297, 80
          %v2385 = vpop.permute.xlu0 %2384
          %2388 = vrot.lane.b32.xlu0 %v2294, 96
          %v2389 = vpop.permute.xlu0 %2388
          %2392 = vrot.lane.b32.xlu0 %v2298, 112
          %v2393 = vpop.permute.xlu0 %2392
          %2396 = vrot.lane.b32.xlu0 %v2363, 16
          %v2397 = vpop.permute.xlu0 %2396
          %2400 = vrot.lane.b32.xlu0 %v2346, 32
          %v2401 = vpop.permute.xlu0 %2400
          %2404 = vrot.lane.b32.xlu0 %v2364, 48
          %v2405 = vpop.permute.xlu0 %2404
          %2408 = vrot.lane.b32.xlu0 %v2355, 64
          %v2409 = vpop.permute.xlu0 %2408
          %2412 = vrot.lane.b32.xlu0 %v2365, 80
          %v2413 = vpop.permute.xlu0 %2412
          %2416 = vrot.lane.b32.xlu0 %v2362, 96
          %v2417 = vpop.permute.xlu0 %2416
          %2420 = vrot.lane.b32.xlu0 %v2366, 112
          %v2421 = vpop.permute.xlu0 %2420
          %v2423 = vsel %vm472, %v2271, %v2369
          %v2424 = vsel %vm474, %v2423, %v2373
          %v2425 = vsel %vm476, %v2424, %v2377
          %v2426 = vsel %vm478, %v2425, %v2381
          %v2427 = vsel %vm480, %v2426, %v2385
          %v2428 = vsel %vm482, %v2427, %v2389
          %v2429 = vsel %vm484, %v2428, %v2393
          %v2430 = vsel %vm472, %v2339, %v2397
          %v2431 = vsel %vm474, %v2430, %v2401
          %v2432 = vsel %vm476, %v2431, %v2405
          %v2433 = vsel %vm478, %v2432, %v2409
          %v2434 = vsel %vm480, %v2433, %v2413
          %v2435 = vsel %vm482, %v2434, %v2417
          %v2436 = vsel %vm484, %v2435, %v2421
          %2437 = vst [vmem:[#allocation3 + $0x40] sm:$0xf] %v2429
          %2438 = vst [vmem:[#allocation3 + $0x48] sm:$0xf] %v2436
        $region40: #{tpu_custom_call.1} parent=27 // pred_fallthru
          _
        %v2439 = vld [vmem:[#allocation7] sm:$0xf]
        %v2440 = vld [vmem:[#allocation3] sm:$0xff]
        %v2441 = vld [vmem:[#allocation3 + $0x8] sm:$0xff]
        %v2442 = vld [vmem:[#allocation3 + $0x10] sm:$0xff]
        %v2443 = vld [vmem:[#allocation3 + $0x18] sm:$0xff]
        %v2444 = vld [vmem:[#allocation3 + $0x20] sm:$0xff]
        %v2445 = vld [vmem:[#allocation3 + $0x28] sm:$0xff]
        %v2446 = vld [vmem:[#allocation3 + $0x30] sm:$0xff]
        %v2447 = vld [vmem:[#allocation3 + $0x38] sm:$0xff]
        %v2448 = vld [vmem:[#allocation3 + $0x40] sm:$0xf]
        %v2449 = vld [vmem:[#allocation3 + $0x48] sm:$0xf]
        %v2450 = vpack.c.bf16 %v2442, %v2440
        %v2451 = vpack.c.bf16 %v2443, %v2441
        %v2452 = vpack.c.bf16 %v2446, %v2444
        %v2453 = vpack.c.bf16 %v2447, %v2445
        %v2454 = vpack.c.bf16 %v2448, %v2448
        %v2455 = vpack.c.bf16 %v2449, %v2449
        %vm2456 = vcmask 293888
        %v2458 = vsel %vm2456, %v2439, 0
        %vm2460 = vcmask 1041408
        %v2462 = vsel %vm2460, %v2454, 0
        %v2465 = vsel %vm2460, %v2455, 0
        %2467 = vmatprep.subr.bf16.mxu0 %v2451
        %2468 = vmatpush1.bf16.msra.mxu0 %v2450
        %2469 = vmatprep.subr.bf16.mxu0 %v2453
        %2470 = vmatpush1.bf16.msra.mxu0 %v2452
        %2471 = vmatprep.subr.bf16.mxu0 %v2465
        %2472 = vmatpush1.bf16.msra.mxu0 %v2462
        %2473 = vmatprep.subr.bf16.mxu0 0
        %2474 = vmatpush1.bf16.msra.mxu0 0
        %2475 = vmatprep.subr.bf16.mxu0 0
        %2476 = vmatpush1.bf16.msra.mxu0 0
        %2477 = vmatprep.subr.bf16.mxu0 0
        %2478 = vmatpush1.bf16.msra.mxu0 0
        %2479 = vmatprep.subr.bf16.mxu0 0
        %2480 = vmatpush1.bf16.msra.mxu0 0
        %2481 = vmatprep.subr.bf16.mxu0 0
        %2482 = vmatpush1.bf16.msra.mxu0 0
        %2483 = vmatprep.subr.bf16.mxu0 0
        %2484 = vmatpush1.bf16.msra.mxu0 0
        %2485 = vmatprep.subr.bf16.mxu0 0
        %2486 = vmatpush1.bf16.msra.mxu0 0
        %2487 = vmatprep.subr.bf16.mxu0 0
        %2488 = vmatpush1.bf16.msra.mxu0 0
        %2489 = vmatprep.subr.bf16.mxu0 0
        %2490 = vmatpush1.bf16.msra.mxu0 0
        %2491 = vmatprep.subr.bf16.mxu0 0
        %2492 = vmatpush1.bf16.msra.mxu0 0
        %2493 = vmatprep.subr.bf16.mxu0 0
        %2494 = vmatpush1.bf16.msra.mxu0 0
        %2495 = vmatprep.subr.bf16.mxu0 0
        %2496 = vmatpush1.bf16.msra.mxu0 0
        %2497 = vmatprep.subr.bf16.mxu0 0
        %2498 = vmatpush1.bf16.msra.mxu0 0
        %2499 = vmatprep.mubr.bf16.mxu0 0
        %2500 = vmatmul.mubr.bf16.gmra.mrb[0].mxu0 %v2458
        %v2501 = vpop.f32.mrb[0].mxu0
        %v2502 = vadd.f32 0.0, %v2501
        %v2503 = vpop.f32.mrb[0].mxu0
        %v2504 = vadd.f32 0.0, %v2503
        %v2505 = vpop.f32.mrb[0].mxu0
        %v2506 = vpop.f32.mrb[0].mxu0
        %2507 = vdwg.mxu0
        %2508 = vst [vmem:[%s195] sm:$0xff] %v2502
        %2509 = vst [vmem:[%s195 + $0x8] sm:$0xff] %v2504
        %s2510 = sand.u32 %s94, 1
        %s2511 = scalar_lea.sflag [#allocation6], %s2510
        %s2512 = sand.u32 %s94, 1
        %s2513 = smul.addr %s2512, 16
        %s2514 = scalar_lea.vmem [#allocation9], %s2513
        // Predicated region
        $region41: #{tpu_custom_call.1} parent=27 // pred_check
          %p2515 = pneg %p104
        $region42: #{tpu_custom_call.1} parent=27 // pred_check_branch
          %2517 = sbr.rel (%p2515) target = $region44
        $region43: #{tpu_custom_call.1} parent=27 // pred_region
          %s2519 = ssub.s32 256, 256
          %2520 = vsyncadd %s2511, %s2519
          %s2521 = smul.addr %s25, 2
          %s2522 = smul.addr %s24, 2
          %s2523 = sadd.s32 %s2521, %s2522
          %s2524 = smul.addr %s2523, 128
          %s2525 = scalar_lea.hbm %s2, %s2524
          %s2527 = sshll.u32 %s2514, 4
          %s2528 = int_to_ptr.vmem [resolvable:$true] %s2527
          %2530 = dma.vmem_to_hbm [thread:$0]  %s2528, 256, %s2525, %s2511
        $region44: #{tpu_custom_call.1} parent=27 // pred_fallthru
          _
      $region28: #{tpu_custom_call.1} parent=5 // pred_fallthru
        _
      %p2531 = scmp.le.s32.totalorder 2, %s15
      // Predicated region
      $region45: #{tpu_custom_call.1} parent=5 // pred_check
        %p2532 = pneg %p2531
      $region46: #{tpu_custom_call.1} parent=5 // pred_check_branch
        %2534 = sbr.rel (%p2532) target = $region48
      $region47: #{tpu_custom_call.1} parent=5 // pred_region
        %s2535 = ssub.s32 %s15, 2
        // Predicated region
        $region49: #{tpu_custom_call.1} parent=47 // pred_check
          %p2536 = pneg %p110
        $region50: #{tpu_custom_call.1} parent=47 // pred_check_branch
          %2538 = sbr.rel (%p2536) target = $region52
        $region51: #{tpu_custom_call.1} parent=47 // pred_region
          %s2539 = sand.u32 %s95, 1
          %s2540 = scalar_lea.sflag [#allocation6], %s2539
          %s2541 = sand.u32 %s95, 1
          %s2542 = smul.addr %s2541, 16
          %s2543 = scalar_lea.vmem [#allocation9], %s2542
          %2544 = dma.done %s2540, 256
        $region52: #{tpu_custom_call.1} parent=47 // pred_fallthru
          _
      $region48: #{tpu_custom_call.1} parent=5 // pred_fallthru
        _
    $region6: #{tpu_custom_call.1} parent=1 // loop_footer
      %s19 = sadd.s32 1, %s15
    $region7: #{tpu_custom_call.1} parent=1 // loop_footer_branch
      %14 = sbr.rel target = $region3
    $region8: #{tpu_custom_call.1} parent=1 // loop_exit
      _
    %2545 = vsyncpa [#allocation5], 1
    %s2546 = scalar_lea.sflag [#allocation5], 1
    %2547 = vsyncpa %s2546, 1
    %2548 = vsyncpa [#allocation8], 1
    %2549 = vsyncpa [#allocation6], 1
    %s2550 = scalar_lea.sflag [#allocation6], 1
    %2551 = vsyncpa %s2550, 1

</llo_original>
